<compile_context>
chip_gen: v7x
topology: tpu7x:2x2x1
jax: 0.10.0
libtpu: 0.0.40
codegen_flags: <defaults>
</compile_context>

<pallas_src>
import functools

import jax
import jax.numpy as jnp
import numpy as np
from jax.experimental import pallas as pl
from jax.experimental.pallas import tpu as pltpu

LANE = 128
SUB = 8


def _rup(x, m):
    return ((x + m - 1) // m) * m


def _vmem_capacity_bytes():
    try:
        return int(pltpu.get_tpu_info().vmem_capacity_bytes)
    except Exception:
        return 64 * 1024 * 1024


# ----------------------------------------------------------------------------- kernels


def _enc_proj_kernel(enc_ref, wae_ref, ba_ref, out_ref):
    """Token-independent encoder projection: e_enc = enc @ W_ae + b_a (bf16 in / bf16 out)."""
    tb, s8, hp = enc_ref.shape
    enc2d = enc_ref[...].reshape(tb * s8, hp)            # s8 is a multiple of 8 -> free collapse
    proj = jnp.dot(enc2d, wae_ref[...], preferred_element_type=jnp.float32)
    proj = proj + ba_ref[...]
    out_ref[...] = proj.reshape(tb, s8, hp).astype(out_ref.dtype)


def _decoder_step_kernel(s_valid, hp,
                         emb_ref, h_ref, enc_ref, eenc_ref,
                         wh_ref, bh_ref, v_ref,
                         wih_ref, bih_ref,
                         wfc_ref, bfc_ref,
                         logits_ref, hnew_ref, attn_ref,
                         xcat_ref, ocat_ref):
    emb = emb_ref[...]                                   # [tb, Ep]  f32
    h = h_ref[...]                                       # [tb, Hp]  f32
    enc = enc_ref[...].astype(jnp.float32)               # [tb, S8, Hp] (bf16 storage)
    eenc = eenc_ref[...].astype(jnp.float32)             # [tb, S8, Hp] (bf16 storage)
    tb, s8, _ = enc.shape
    ep = emb.shape[-1]

    # ---- single fused h-side dot: [e_h | gh] = h @ [W_ah | W_hh] + [0 | b_hh] ----------
    hcat = jnp.dot(h, wh_ref[...], preferred_element_type=jnp.float32) + bh_ref[...]
    e_h = hcat[:, :hp]                                   # attention h-projection
    gh = hcat[:, hp:]                                    # GRU hidden-side gates [tb, 3Hp]

    # ---- additive attention -------------------------------------------------------------
    energy = jnp.tanh(eenc + e_h[:, None, :])            # [tb, s8, Hp]
    scores = jnp.sum(energy * v_ref[...], axis=-1)       # [tb, s8]
    col = jax.lax.broadcasted_iota(jnp.int32, (tb, s8), 1)
    scores = jnp.where(col < s_valid, scores, -1e30)     # mask padded sequence positions
    scores = scores - jnp.max(scores, axis=-1, keepdims=True)
    ex = jnp.exp(scores)
    a = ex / jnp.sum(ex, axis=-1, keepdims=True)         # exact softmax (reference parity)

    # weighted context: VPU multiply + sublane reduce (no per-row MXU drains)
    weighted = jnp.sum(a[:, :, None] * enc, axis=1)      # [tb, Hp]

    # ---- GRU cell (PyTorch gate order r, z, n); fused input matmul via aligned scratch --
    xcat_ref[:, :ep] = emb
    xcat_ref[:, ep:] = weighted
    gi = jnp.dot(xcat_ref[...], wih_ref[...], preferred_element_type=jnp.float32) + bih_ref[...]
    r = jax.nn.sigmoid(gi[:, :hp] + gh[:, :hp])
    z = jax.nn.sigmoid(gi[:, hp:2 * hp] + gh[:, hp:2 * hp])
    n = jnp.tanh(gi[:, 2 * hp:] + r * gh[:, 2 * hp:])
    h_new = (1.0 - z) * n + z * h                        # [tb, Hp]

    # ---- output projection: one fused dot from [h_new ; weighted ; emb] scratch ---------
    ocat_ref[:, :hp] = h_new
    ocat_ref[:, hp:2 * hp] = weighted
    ocat_ref[:, 2 * hp:] = emb
    logits = jnp.dot(ocat_ref[...], wfc_ref[...], preferred_element_type=jnp.float32) + bfc_ref[...]

    logits_ref[...] = logits
    hnew_ref[...] = h_new
    attn_ref[...] = a


# ----------------------------------------------------------------------------- wrapper


def pad_decoder_params(params):
    """Pad and stack logical parameters into lane-aligned kernel weights (done once)."""
    O, E = params["emb_table"].shape
    H = params["w_hh"].shape[0]
    Ep, Hp, Op = _rup(E, LANE), _rup(H, LANE), _rup(O, LANE)

    def zpad2(x, shape, dtype=jnp.float32):
        out = jnp.zeros(shape, dtype)
        return out.at[: x.shape[0], : x.shape[1]].set(x.astype(dtype))

    # fused h-side weight: [W_attn_h | W_hh (each gate in its own Hp block)], bias [0 | b_hh]
    w_h = jnp.zeros((Hp, 4 * Hp), jnp.float32)
    b_h = jnp.zeros((1, 4 * Hp), jnp.float32)
    w_h = w_h.at[:H, :H].set(params["w_attn_h"])
    for g in range(3):
        cols = slice(Hp + g * Hp, Hp + g * Hp + H)
        src = slice(g * H, (g + 1) * H)
        w_h = w_h.at[:H, cols].set(params["w_hh"][:, src])
        b_h = b_h.at[:, cols].set(params["b_hh"][:, src])

    # GRU input weight stacked over [emb ; weighted] rows, gate cols padded per Hp block
    w_ih = jnp.zeros((Ep + Hp, 3 * Hp), jnp.float32)
    b_ih = jnp.zeros((1, 3 * Hp), jnp.float32)
    for g in range(3):
        cols = slice(g * Hp, g * Hp + H)
        src = slice(g * H, (g + 1) * H)
        w_ih = w_ih.at[:E, cols].set(params["w_ih_e"][:, src])
        w_ih = w_ih.at[Ep:Ep + H, cols].set(params["w_ih_w"][:, src])
        b_ih = b_ih.at[:, cols].set(params["b_ih"][:, src])

    # FC weight stacked for the fused [h_new ; weighted ; emb] input
    w_fc = jnp.zeros((2 * Hp + Ep, Op), jnp.float32)
    w_fc = w_fc.at[:H, :O].set(params["w_fc_o"])
    w_fc = w_fc.at[Hp:Hp + H, :O].set(params["w_fc_w"])
    w_fc = w_fc.at[2 * Hp:2 * Hp + E, :O].set(params["w_fc_e"])

    return {
        "dims": (O, E, H),
        "emb_table": params["emb_table"],
        "w_attn_e_bf16": zpad2(params["w_attn_e"], (Hp, Hp), jnp.bfloat16),
        "b_attn": zpad2(params["b_attn"], (1, Hp)),
        "v_attn": zpad2(params["v_attn"], (1, Hp)),
        "w_h_stack": w_h, "b_h_stack": b_h,
        "w_ih": w_ih, "b_ih": b_ih,
        "w_fc": w_fc, "b_fc": zpad2(params["b_fc"], (1, Op)),
    }


def decoder_forward(tokens, hidden, encoder_outputs, padded):
    """Pallas-backed forward pass.

    tokens:          [B] int32
    hidden:          [1, B, H] float32
    encoder_outputs: [B, S, H] float32
    returns (logits [B, O], hidden [1, B, H], attn [B, S])
    """
    O, E, H = padded["dims"]
    B, S, _ = encoder_outputs.shape
    Ep, Hp, Op = _rup(E, LANE), _rup(H, LANE), _rup(O, LANE)
    S8 = _rup(S, SUB)          # S only needs sublane (x8) padding on the 3-D blocks

    # ---- generation-aware VMEM budget & batch tile --------------------------------------
    vmem_cap = _vmem_capacity_bytes()                          # 128 MiB v5e/v6e, 64 MiB v7x
    vmem_limit = max(32 << 20, min(int(vmem_cap * 0.75), 100 << 20))

    f32b, bf16b = 4, 2
    weights_bytes = (f32b * (Hp * 4 * Hp + 4 * Hp + Hp
                             + (Ep + Hp) * 3 * Hp + 3 * Hp
                             + (2 * Hp + Ep) * Op + Op)
                     + bf16b * Hp * Hp)
    per_row = 2 * (2 * S8 * Hp * bf16b                 # double-buffered enc + e_enc (bf16)
                   + (Ep + Hp) * f32b                  # emb + h inputs
                   + (Op + Hp + S8) * f32b)            # logits + h_new + attn outputs
    per_row += (Ep + Hp + 2 * Hp + Ep) * f32b          # x_cat / o_cat scratch
    budget = max(vmem_limit - weights_bytes - (4 << 20), 1 << 20)
    tb_cap = max(SUB, (budget // per_row) // SUB * SUB)

    B8 = _rup(B, SUB)
    TB = min(tb_cap, B8)
    if B8 >= 2 * SUB:                                  # keep >= 2 grid steps for v7x megacore
        TB = min(TB, max(SUB, (B8 // 2) // SUB * SUB))
    Bp = _rup(B, TB)
    grid = (Bp // TB,)

    # ---- JAX glue: embedding gather + zero padding to aligned shapes --------------------
    tok_p = jnp.pad(tokens.astype(jnp.int32), (0, Bp - B))
    embedded = jnp.take(padded["emb_table"], tok_p, axis=0)               # [Bp, E]
    emb_p = jnp.pad(embedded, ((0, 0), (0, Ep - E)))
    h_p = jnp.pad(hidden[0], ((0, Bp - B), (0, Hp - H)))
    enc_p = jnp.pad(encoder_outputs,
                    ((0, Bp - B), (0, S8 - S), (0, Hp - H))).astype(jnp.bfloat16)

    cparams = pltpu.CompilerParams(
        dimension_semantics=("parallel",),             # shard batch tiles across TCs (v7x)
        vmem_limit_bytes=vmem_limit,
    )

    row3 = lambda b: (b, 0, 0)
    row2 = lambda b: (b, 0)
    full2 = lambda b: (0, 0)

    # ---- kernel 1: hoisted, token-independent encoder projection ------------------------
    e_enc = pl.pallas_call(
        _enc_proj_kernel,
        grid=grid,
        in_specs=[pl.BlockSpec((TB, S8, Hp), row3),
                  pl.BlockSpec((Hp, Hp), full2),
                  pl.BlockSpec((1, Hp), full2)],
        out_specs=pl.BlockSpec((TB, S8, Hp), row3),
        out_shape=jax.ShapeDtypeStruct((Bp, S8, Hp), jnp.bfloat16),
        compiler_params=cparams,
    )(enc_p, padded["w_attn_e_bf16"], padded["b_attn"])

    # ---- kernel 2: fused per-token decoder step ------------------------------------------
    kernel = functools.partial(_decoder_step_kernel, S, Hp)
    logits_p, hnew_p, attn_p = pl.pallas_call(
        kernel,
        grid=grid,
        in_specs=[pl.BlockSpec((TB, Ep), row2),              # embedded token
                  pl.BlockSpec((TB, Hp), row2),              # previous hidden (aliased)
                  pl.BlockSpec((TB, S8, Hp), row3),          # encoder outputs (bf16)
                  pl.BlockSpec((TB, S8, Hp), row3),          # precomputed enc projection (bf16)
                  pl.BlockSpec((Hp, 4 * Hp), full2),         # stacked [W_attn_h | W_hh]
                  pl.BlockSpec((1, 4 * Hp), full2),          # stacked [0 | b_hh]
                  pl.BlockSpec((1, Hp), full2),              # v_attn
                  pl.BlockSpec((Ep + Hp, 3 * Hp), full2),    # stacked W_ih
                  pl.BlockSpec((1, 3 * Hp), full2),          # b_ih
                  pl.BlockSpec((2 * Hp + Ep, Op), full2),    # stacked W_fc
                  pl.BlockSpec((1, Op), full2)],             # b_fc
        out_specs=(pl.BlockSpec((TB, Op), row2),
                   pl.BlockSpec((TB, Hp), row2),
                   pl.BlockSpec((TB, S8), row2)),
        out_shape=(jax.ShapeDtypeStruct((Bp, Op), jnp.float32),
                   jax.ShapeDtypeStruct((Bp, Hp), jnp.float32),
                   jax.ShapeDtypeStruct((Bp, S8), jnp.float32)),
        scratch_shapes=[pltpu.VMEM((TB, Ep + Hp), jnp.float32),       # x_cat scratch
                        pltpu.VMEM((TB, 2 * Hp + Ep), jnp.float32)],  # o_cat scratch
        input_output_aliases={1: 1},                         # hidden updated in place
        compiler_params=cparams,
    )(emb_p, h_p, enc_p, e_enc,
      padded["w_h_stack"], padded["b_h_stack"], padded["v_attn"],
      padded["w_ih"], padded["b_ih"],
      padded["w_fc"], padded["b_fc"])

    # slice off batch / lane padding
    return logits_p[:B, :O], hnew_p[None, :B, :H], attn_p[:B, :S]


# ----------------------------------------------------------------------------- reference


def decoder_reference(tokens, hidden, encoder_outputs, params):
    """Pure-JAX reference mirroring the PyTorch module (unpadded, f32)."""
    embedded = jnp.take(params["emb_table"], tokens, axis=0)
    h = hidden[0]
    enc = encoder_outputs
    H = h.shape[-1]
    e_h = h @ params["w_attn_h"]
    e_enc = jnp.einsum("bsh,hk->bsk", enc, params["w_attn_e"])
    energy = jnp.tanh(e_enc + e_h[:, None, :] + params["b_attn"])
    scores = jnp.sum(energy * params["v_attn"], axis=-1)
    a = jax.nn.softmax(scores, axis=-1)
    weighted = jnp.einsum("bs,bsh->bh", a, enc)
    gi = embedded @ params["w_ih_e"] + weighted @ params["w_ih_w"] + params["b_ih"]
    gh = h @ params["w_hh"] + params["b_hh"]
    r = jax.nn.sigmoid(gi[:, :H] + gh[:, :H])
    z = jax.nn.sigmoid(gi[:, H:2 * H] + gh[:, H:2 * H])
    n = jnp.tanh(gi[:, 2 * H:] + r * gh[:, 2 * H:])
    h_new = (1.0 - z) * n + z * h
    logits = (h_new @ params["w_fc_o"] + weighted @ params["w_fc_w"]
              + embedded @ params["w_fc_e"] + params["b_fc"])
    return logits, h_new[None, :, :], a


def make_params(key, output_dim, emb_dim, hid_dim):
    ks = jax.random.split(key, 16)
    s = 0.1
    f = lambda k, shape: s * jax.random.normal(k, shape, dtype=jnp.float32)
    return {
        "emb_table": f(ks[0], (output_dim, emb_dim)),
        # attention: Linear(2H -> H) split into hidden / encoder halves, plus v: Linear(H -> 1)
        "w_attn_h": f(ks[1], (hid_dim, hid_dim)),
        "w_attn_e": f(ks[2], (hid_dim, hid_dim)),
        "b_attn":   f(ks[3], (1, hid_dim)),
        "v_attn":   f(ks[4], (1, hid_dim)),
        # GRU(hid+emb -> hid), weight_ih split into [emb part, weighted(hid) part]
        "w_ih_e": f(ks[5], (emb_dim, 3 * hid_dim)),
        "w_ih_w": f(ks[6], (hid_dim, 3 * hid_dim)),
        "w_hh":   f(ks[7], (hid_dim, 3 * hid_dim)),
        "b_ih":   f(ks[8], (1, 3 * hid_dim)),
        "b_hh":   f(ks[9], (1, 3 * hid_dim)),
        # fc(2H + E -> O) split into [output(h) part, weighted part, embedded part]
        "w_fc_o": f(ks[10], (hid_dim, output_dim)),
        "w_fc_w": f(ks[11], (hid_dim, output_dim)),
        "w_fc_e": f(ks[12], (emb_dim, output_dim)),
        "b_fc":   f(ks[13], (1, output_dim)),
    }


if __name__ == "__main__":
    B, S = 2, 8
    OUTPUT_DIM, EMB_DIM, HID_DIM = 24, 16, 32

    key = jax.random.PRNGKey(0)
    k_p, k_tok, k_hid, k_enc = jax.random.split(key, 4)

    params = make_params(k_p, OUTPUT_DIM, EMB_DIM, HID_DIM)
    padded = pad_decoder_params(params)

    tokens = jax.random.randint(k_tok, (B,), 0, OUTPUT_DIM, dtype=jnp.int32)
    hidden = 0.1 * jax.random.normal(k_hid, (1, B, HID_DIM), dtype=jnp.float32)
    enc_out = 0.1 * jax.random.normal(k_enc, (B, S, HID_DIM), dtype=jnp.float32)

    fwd = jax.jit(functools.partial(decoder_forward, padded=padded))
    logits, h_new, attn = fwd(tokens, hidden, enc_out)
    jax.block_until_ready((logits, h_new, attn))

    ref_logits, ref_h, ref_a = decoder_reference(tokens, hidden, enc_out, params)
    # tolerance accounts for bf16 storage of enc / e_enc (accumulation stays f32)
    np.testing.assert_allclose(np.asarray(logits), np.asarray(ref_logits), atol=3e-3, rtol=3e-3)
    np.testing.assert_allclose(np.asarray(h_new), np.asarray(ref_h), atol=3e-3, rtol=3e-3)
    np.testing.assert_allclose(np.asarray(attn), np.asarray(ref_a), atol=3e-3, rtol=3e-3)

    assert logits.shape == (B, OUTPUT_DIM)
    assert h_new.shape == (1, B, HID_DIM)
    assert attn.shape == (B, S)
    print("KERNEL_OK")
</pallas_src>

<mosaic_0001>
module attributes {stable_mosaic.version = 11 : i64} {
  func.func @_enc_proj_kernel(%arg0: i32, %arg1: memref<8x8x128xbf16, #tpu.memory_space<vmem>>, %arg2: memref<128x128xbf16, #tpu.memory_space<vmem>>, %arg3: memref<1x128xf32, #tpu.memory_space<vmem>>, %arg4: memref<8x8x128xbf16, #tpu.memory_space<vmem>>) attributes {dimension_semantics = [#tpu.dimension_semantics<parallel>], iteration_bounds = array<i64: 1>, scalar_prefetch = 0 : i64, scratch_operands = 0 : i64, tpu.core_type = #tpu.core_type<tc>, window_params = [{transform_indices = @transform_0, window_bounds = array<i64: 8, 8, 128>}, {pipeline_mode = #tpu.pipeline_mode<synchronous>, transform_indices = @transform_1, window_bounds = array<i64: 128, 128>}, {pipeline_mode = #tpu.pipeline_mode<synchronous>, transform_indices = @transform_2, window_bounds = array<i64: 1, 128>}, {transform_indices = @transform_3, window_bounds = array<i64: 8, 8, 128>}]} {
    %c0 = arith.constant 0 : index
    %c0_0 = arith.constant 0 : index
    %c0_1 = arith.constant 0 : index
    %0 = vector.load %arg1[%c0, %c0_0, %c0_1] : memref<8x8x128xbf16, #tpu.memory_space<vmem>>, vector<8x8x128xbf16>
    %1 = vector.shape_cast %0 : vector<8x8x128xbf16> to vector<64x128xbf16>
    %c0_2 = arith.constant 0 : index
    %c0_3 = arith.constant 0 : index
    %2 = vector.load %arg2[%c0_2, %c0_3] : memref<128x128xbf16, #tpu.memory_space<vmem>>, vector<128x128xbf16>
    %cst = arith.constant dense<0.000000e+00> : vector<64x128xf32>
    %3 = tpu.matmul %1, %2, %cst {dimension_numbers = #tpu.dot_dimension_numbers<[1], [0], [0], [1], [0, 0, 1, 1], [], []>} : vector<64x128xbf16>, vector<128x128xbf16>, vector<64x128xf32> -> vector<64x128xf32>
    %c0_4 = arith.constant 0 : index
    %c0_5 = arith.constant 0 : index
    %4 = vector.load %arg3[%c0_4, %c0_5] : memref<1x128xf32, #tpu.memory_space<vmem>>, vector<1x128xf32>
    %5 = vector.broadcast %4 : vector<1x128xf32> to vector<64x128xf32>
    %6 = arith.addf %3, %5 : vector<64x128xf32>
    %7 = vector.shape_cast %6 : vector<64x128xf32> to vector<8x8x128xf32>
    %8 = arith.truncf %7 : vector<8x8x128xf32> to vector<8x8x128xbf16>
    %c0_6 = arith.constant 0 : index
    %c0_7 = arith.constant 0 : index
    %c0_8 = arith.constant 0 : index
    %9 = vector.load %arg4[%c0_6, %c0_7, %c0_8] : memref<8x8x128xbf16, #tpu.memory_space<vmem>>, vector<8x8x128xbf16>
    tpu.vector_store %arg4[%c0_6, %c0_7, %c0_8], %8 {strides = array<i32>} : memref<8x8x128xbf16, #tpu.memory_space<vmem>>, vector<8x8x128xbf16>,
    return
  }
  func.func @transform_0(%arg0: i32) -> (i32, i32, i32) {
    %c0_i32 = arith.constant 0 : i32
    %c0_i32_0 = arith.constant 0 : i32
    %c0_i32_1 = arith.constant 0 : i32
    return %arg0, %c0_i32, %c0_i32_0 : i32, i32, i32
  }
  func.func @transform_1(%arg0: i32) -> (i32, i32) {
    %c0_i32 = arith.constant 0 : i32
    %c0_i32_0 = arith.constant 0 : i32
    %c0_i32_1 = arith.constant 0 : i32
    return %c0_i32, %c0_i32_0 : i32, i32
  }
  func.func @transform_2(%arg0: i32) -> (i32, i32) {
    %c0_i32 = arith.constant 0 : i32
    %c0_i32_0 = arith.constant 0 : i32
    %c0_i32_1 = arith.constant 0 : i32
    return %c0_i32, %c0_i32_0 : i32, i32
  }
  func.func @transform_3(%arg0: i32) -> (i32, i32, i32) {
    %c0_i32 = arith.constant 0 : i32
    %c0_i32_0 = arith.constant 0 : i32
    %c0_i32_1 = arith.constant 0 : i32
    return %arg0, %c0_i32, %c0_i32_0 : i32, i32, i32
  }
}

module attributes {stable_mosaic.version = 11 : i64} {
  func.func @_decoder_step_kernel(%arg0: i32, %arg1: memref<8x128xf32, #tpu.memory_space<vmem>>, %arg2: memref<8x128xf32, #tpu.memory_space<vmem>>, %arg3: memref<8x8x128xbf16, #tpu.memory_space<vmem>>, %arg4: memref<8x8x128xbf16, #tpu.memory_space<vmem>>, %arg5: memref<128x512xf32, #tpu.memory_space<vmem>>, %arg6: memref<1x512xf32, #tpu.memory_space<vmem>>, %arg7: memref<1x128xf32, #tpu.memory_space<vmem>>, %arg8: memref<256x384xf32, #tpu.memory_space<vmem>>, %arg9: memref<1x384xf32, #tpu.memory_space<vmem>>, %arg10: memref<384x128xf32, #tpu.memory_space<vmem>>, %arg11: memref<1x128xf32, #tpu.memory_space<vmem>>, %arg12: memref<8x128xf32, #tpu.memory_space<vmem>>, %arg13: memref<8x128xf32, #tpu.memory_space<vmem>>, %arg14: memref<8x8xf32, #tpu.memory_space<vmem>>, %arg15: memref<8x256xf32, #tpu.memory_space<vmem>>, %arg16: memref<8x384xf32, #tpu.memory_space<vmem>>) attributes {dimension_semantics = [#tpu.dimension_semantics<parallel>], iteration_bounds = array<i64: 1>, scalar_prefetch = 0 : i64, scratch_operands = 2 : i64, tpu.core_type = #tpu.core_type<tc>, window_params = [{transform_indices = @transform_0, window_bounds = array<i64: 8, 128>}, {transform_indices = @transform_1, window_bounds = array<i64: 8, 128>}, {transform_indices = @transform_2, window_bounds = array<i64: 8, 8, 128>}, {transform_indices = @transform_3, window_bounds = array<i64: 8, 8, 128>}, {pipeline_mode = #tpu.pipeline_mode<synchronous>, transform_indices = @transform_4, window_bounds = array<i64: 128, 512>}, {pipeline_mode = #tpu.pipeline_mode<synchronous>, transform_indices = @transform_5, window_bounds = array<i64: 1, 512>}, {pipeline_mode = #tpu.pipeline_mode<synchronous>, transform_indices = @transform_6, window_bounds = array<i64: 1, 128>}, {pipeline_mode = #tpu.pipeline_mode<synchronous>, transform_indices = @transform_7, window_bounds = array<i64: 256, 384>}, {pipeline_mode = #tpu.pipeline_mode<synchronous>, transform_indices = @transform_8, window_bounds = array<i64: 1, 384>}, {pipeline_mode = #tpu.pipeline_mode<synchronous>, transform_indices = @transform_9, window_bounds = array<i64: 384, 128>}, {pipeline_mode = #tpu.pipeline_mode<synchronous>, transform_indices = @transform_10, window_bounds = array<i64: 1, 128>}, {transform_indices = @transform_11, window_bounds = array<i64: 8, 128>}, {transform_indices = @transform_12, window_bounds = array<i64: 8, 128>}, {transform_indices = @transform_13, window_bounds = array<i64: 8, 8>}]} {
    %c0 = arith.constant 0 : index
    %c0_0 = arith.constant 0 : index
    %0 = vector.load %arg1[%c0, %c0_0] : memref<8x128xf32, #tpu.memory_space<vmem>>, vector<8x128xf32>
    %c0_1 = arith.constant 0 : index
    %c0_2 = arith.constant 0 : index
    %1 = vector.load %arg2[%c0_1, %c0_2] : memref<8x128xf32, #tpu.memory_space<vmem>>, vector<8x128xf32>
    %c0_3 = arith.constant 0 : index
    %c0_4 = arith.constant 0 : index
    %c0_5 = arith.constant 0 : index
    %2 = vector.load %arg3[%c0_3, %c0_4, %c0_5] : memref<8x8x128xbf16, #tpu.memory_space<vmem>>, vector<8x8x128xbf16>
    %3 = arith.extf %2 : vector<8x8x128xbf16> to vector<8x8x128xf32>
    %c0_6 = arith.constant 0 : index
    %c0_7 = arith.constant 0 : index
    %c0_8 = arith.constant 0 : index
    %4 = vector.load %arg4[%c0_6, %c0_7, %c0_8] : memref<8x8x128xbf16, #tpu.memory_space<vmem>>, vector<8x8x128xbf16>
    %5 = arith.extf %4 : vector<8x8x128xbf16> to vector<8x8x128xf32>
    %c0_9 = arith.constant 0 : index
    %c0_10 = arith.constant 0 : index
    %6 = vector.load %arg5[%c0_9, %c0_10] : memref<128x512xf32, #tpu.memory_space<vmem>>, vector<128x512xf32>
    %cst = arith.constant dense<0.000000e+00> : vector<8x512xf32>
    %7 = tpu.matmul %1, %6, %cst {dimension_numbers = #tpu.dot_dimension_numbers<[1], [0], [0], [1], [0, 0, 1, 1], [], []>} : vector<8x128xf32>, vector<128x512xf32>, vector<8x512xf32> -> vector<8x512xf32>
    %c0_11 = arith.constant 0 : index
    %c0_12 = arith.constant 0 : index
    %8 = vector.load %arg6[%c0_11, %c0_12] : memref<1x512xf32, #tpu.memory_space<vmem>>, vector<1x512xf32>
    %9 = vector.broadcast %8 : vector<1x512xf32> to vector<8x512xf32>
    %10 = arith.addf %7, %9 : vector<8x512xf32>
    %11 = vector.extract_strided_slice %10 {offsets = [0, 0], sizes = [8, 128], strides = [1, 1]} : vector<8x512xf32> to vector<8x128xf32>
    %12 = vector.extract_strided_slice %10 {offsets = [0, 128], sizes = [8, 384], strides = [1, 1]} : vector<8x512xf32> to vector<8x384xf32>
    %13 = vector.shape_cast %11 : vector<8x128xf32> to vector<8x1x128xf32>
    %14 = vector.broadcast %13 : vector<8x1x128xf32> to vector<8x8x128xf32>
    %15 = arith.addf %5, %14 : vector<8x8x128xf32>
    %16 = math.tanh %15 : vector<8x8x128xf32>
    %c0_13 = arith.constant 0 : index
    %c0_14 = arith.constant 0 : index
    %17 = vector.load %arg7[%c0_13, %c0_14] : memref<1x128xf32, #tpu.memory_space<vmem>>, vector<1x128xf32>
    %18 = vector.shape_cast %17 : vector<1x128xf32> to vector<1x1x128xf32>
    %19 = vector.broadcast %18 : vector<1x1x128xf32> to vector<8x8x128xf32>
    %20 = arith.mulf %16, %19 : vector<8x8x128xf32>
    %cst_15 = arith.constant dense<0.000000e+00> : vector<8x8xf32>
    %21 = vector.multi_reduction <add>, %20, %cst_15 [2] : vector<8x8x128xf32> to vector<8x8xf32>
    %22 = tpu.iota {dimensions = array<i32: 1>} : vector<8x8xi32>
    %c8_i32 = arith.constant 8 : i32
    %23 = vector.broadcast %c8_i32 : i32 to vector<8x8xi32>
    %24 = arith.cmpi slt, %22, %23 : vector<8x8xi32>
    %cst_16 = arith.constant -1.000000e+30 : f32
    %25 = vector.broadcast %cst_16 : f32 to vector<8x8xf32>
    %26 = arith.select %24, %21, %25 : vector<8x8xi1>, vector<8x8xf32>
    %cst_17 = arith.constant dense<0xFF800000> : vector<8xf32>
    %27 = vector.multi_reduction <maximumf>, %26, %cst_17 [1] : vector<8x8xf32> to vector<8xf32>
    %28 = vector.shape_cast %27 : vector<8xf32> to vector<8x1xf32>
    %29 = vector.broadcast %28 : vector<8x1xf32> to vector<8x8xf32>
    %30 = arith.subf %26, %29 : vector<8x8xf32>
    %31 = math.exp %30 : vector<8x8xf32>
    %cst_18 = arith.constant dense<0.000000e+00> : vector<8xf32>
    %32 = vector.multi_reduction <add>, %31, %cst_18 [1] : vector<8x8xf32> to vector<8xf32>
    %33 = vector.shape_cast %32 : vector<8xf32> to vector<8x1xf32>
    %34 = vector.broadcast %33 : vector<8x1xf32> to vector<8x8xf32>
    %35 = arith.divf %31, %34 : vector<8x8xf32>
    %36 = vector.shape_cast %35 : vector<8x8xf32> to vector<8x8x1xf32>
    %37 = vector.broadcast %36 : vector<8x8x1xf32> to vector<8x8x128xf32>
    %38 = arith.mulf %37, %3 : vector<8x8x128xf32>
    %cst_19 = arith.constant dense<0.000000e+00> : vector<8x128xf32>
    %39 = vector.multi_reduction <add>, %38, %cst_19 [1] : vector<8x8x128xf32> to vector<8x128xf32>
    %c0_20 = arith.constant 0 : index
    %c0_21 = arith.constant 0 : index
    %40 = vector.load %arg15[%c0_20, %c0_21] : memref<8x256xf32, #tpu.memory_space<vmem>>, vector<8x128xf32>
    tpu.vector_store %arg15[%c0_20, %c0_21], %0 {strides = array<i32>} : memref<8x256xf32, #tpu.memory_space<vmem>>, vector<8x128xf32>,
    %c0_22 = arith.constant 0 : index
    %c128 = arith.constant 128 : index
    %41 = vector.load %arg15[%c0_22, %c128] : memref<8x256xf32, #tpu.memory_space<vmem>>, vector<8x128xf32>
    tpu.vector_store %arg15[%c0_22, %c128], %39 {strides = array<i32>} : memref<8x256xf32, #tpu.memory_space<vmem>>, vector<8x128xf32>,
    %c0_23 = arith.constant 0 : index
    %c0_24 = arith.constant 0 : index
    %42 = vector.load %arg15[%c0_23, %c0_24] : memref<8x256xf32, #tpu.memory_space<vmem>>, vector<8x256xf32>
    %c0_25 = arith.constant 0 : index
    %c0_26 = arith.constant 0 : index
    %43 = vector.load %arg8[%c0_25, %c0_26] : memref<256x384xf32, #tpu.memory_space<vmem>>, vector<256x384xf32>
    %cst_27 = arith.constant dense<0.000000e+00> : vector<8x384xf32>
    %44 = tpu.matmul %42, %43, %cst_27 {dimension_numbers = #tpu.dot_dimension_numbers<[1], [0], [0], [1], [0, 0, 1, 1], [], []>} : vector<8x256xf32>, vector<256x384xf32>, vector<8x384xf32> -> vector<8x384xf32>
    %c0_28 = arith.constant 0 : index
    %c0_29 = arith.constant 0 : index
    %45 = vector.load %arg9[%c0_28, %c0_29] : memref<1x384xf32, #tpu.memory_space<vmem>>, vector<1x384xf32>
    %46 = vector.broadcast %45 : vector<1x384xf32> to vector<8x384xf32>
    %47 = arith.addf %44, %46 : vector<8x384xf32>
    %48 = vector.extract_strided_slice %47 {offsets = [0, 0], sizes = [8, 128], strides = [1, 1]} : vector<8x384xf32> to vector<8x128xf32>
    %49 = vector.extract_strided_slice %12 {offsets = [0, 0], sizes = [8, 128], strides = [1, 1]} : vector<8x384xf32> to vector<8x128xf32>
    %50 = arith.addf %48, %49 : vector<8x128xf32>
    %51 = arith.negf %50 : vector<8x128xf32>
    %52 = math.exp %51 : vector<8x128xf32>
    %cst_30 = arith.constant 1.000000e+00 : f32
    %53 = vector.broadcast %cst_30 : f32 to vector<8x128xf32>
    %54 = arith.addf %53, %52 : vector<8x128xf32>
    %55 = arith.divf %53, %54 : vector<8x128xf32>
    %56 = vector.extract_strided_slice %47 {offsets = [0, 128], sizes = [8, 128], strides = [1, 1]} : vector<8x384xf32> to vector<8x128xf32>
    %57 = vector.extract_strided_slice %12 {offsets = [0, 128], sizes = [8, 128], strides = [1, 1]} : vector<8x384xf32> to vector<8x128xf32>
    %58 = arith.addf %56, %57 : vector<8x128xf32>
    %59 = arith.negf %58 : vector<8x128xf32>
    %60 = math.exp %59 : vector<8x128xf32>
    %cst_31 = arith.constant 1.000000e+00 : f32
    %61 = vector.broadcast %cst_31 : f32 to vector<8x128xf32>
    %62 = arith.addf %61, %60 : vector<8x128xf32>
    %63 = arith.divf %61, %62 : vector<8x128xf32>
    %64 = vector.extract_strided_slice %47 {offsets = [0, 256], sizes = [8, 128], strides = [1, 1]} : vector<8x384xf32> to vector<8x128xf32>
    %65 = vector.extract_strided_slice %12 {offsets = [0, 256], sizes = [8, 128], strides = [1, 1]} : vector<8x384xf32> to vector<8x128xf32>
    %66 = arith.mulf %55, %65 : vector<8x128xf32>
    %67 = arith.addf %64, %66 : vector<8x128xf32>
    %68 = math.tanh %67 : vector<8x128xf32>
    %cst_32 = arith.constant 1.000000e+00 : f32
    %69 = vector.broadcast %cst_32 : f32 to vector<8x128xf32>
    %70 = arith.subf %69, %63 : vector<8x128xf32>
    %71 = arith.mulf %70, %68 : vector<8x128xf32>
    %72 = arith.mulf %63, %1 : vector<8x128xf32>
    %73 = arith.addf %71, %72 : vector<8x128xf32>
    %c0_33 = arith.constant 0 : index
    %c0_34 = arith.constant 0 : index
    %74 = vector.load %arg16[%c0_33, %c0_34] : memref<8x384xf32, #tpu.memory_space<vmem>>, vector<8x128xf32>
    tpu.vector_store %arg16[%c0_33, %c0_34], %73 {strides = array<i32>} : memref<8x384xf32, #tpu.memory_space<vmem>>, vector<8x128xf32>,
    %c0_35 = arith.constant 0 : index
    %c128_36 = arith.constant 128 : index
    %75 = vector.load %arg16[%c0_35, %c128_36] : memref<8x384xf32, #tpu.memory_space<vmem>>, vector<8x128xf32>
    tpu.vector_store %arg16[%c0_35, %c128_36], %39 {strides = array<i32>} : memref<8x384xf32, #tpu.memory_space<vmem>>, vector<8x128xf32>,
    %c0_37 = arith.constant 0 : index
    %c256 = arith.constant 256 : index
    %76 = vector.load %arg16[%c0_37, %c256] : memref<8x384xf32, #tpu.memory_space<vmem>>, vector<8x128xf32>
    tpu.vector_store %arg16[%c0_37, %c256], %0 {strides = array<i32>} : memref<8x384xf32, #tpu.memory_space<vmem>>, vector<8x128xf32>,
    %c0_38 = arith.constant 0 : index
    %c0_39 = arith.constant 0 : index
    %77 = vector.load %arg16[%c0_38, %c0_39] : memref<8x384xf32, #tpu.memory_space<vmem>>, vector<8x384xf32>
    %c0_40 = arith.constant 0 : index
    %c0_41 = arith.constant 0 : index
    %78 = vector.load %arg10[%c0_40, %c0_41] : memref<384x128xf32, #tpu.memory_space<vmem>>, vector<384x128xf32>
    %cst_42 = arith.constant dense<0.000000e+00> : vector<8x128xf32>
    %79 = tpu.matmul %77, %78, %cst_42 {dimension_numbers = #tpu.dot_dimension_numbers<[1], [0], [0], [1], [0, 0, 1, 1], [], []>} : vector<8x384xf32>, vector<384x128xf32>, vector<8x128xf32> -> vector<8x128xf32>
    %c0_43 = arith.constant 0 : index
    %c0_44 = arith.constant 0 : index
    %80 = vector.load %arg11[%c0_43, %c0_44] : memref<1x128xf32, #tpu.memory_space<vmem>>, vector<1x128xf32>
    %81 = vector.broadcast %80 : vector<1x128xf32> to vector<8x128xf32>
    %82 = arith.addf %79, %81 : vector<8x128xf32>
    %c0_45 = arith.constant 0 : index
    %c0_46 = arith.constant 0 : index
    %83 = vector.load %arg12[%c0_45, %c0_46] : memref<8x128xf32, #tpu.memory_space<vmem>>, vector<8x128xf32>
    tpu.vector_store %arg12[%c0_45, %c0_46], %82 {strides = array<i32>} : memref<8x128xf32, #tpu.memory_space<vmem>>, vector<8x128xf32>,
    %c0_47 = arith.constant 0 : index
    %c0_48 = arith.constant 0 : index
    %84 = vector.load %arg13[%c0_47, %c0_48] : memref<8x128xf32, #tpu.memory_space<vmem>>, vector<8x128xf32>
    tpu.vector_store %arg13[%c0_47, %c0_48], %73 {strides = array<i32>} : memref<8x128xf32, #tpu.memory_space<vmem>>, vector<8x128xf32>,
    %c0_49 = arith.constant 0 : index
    %c0_50 = arith.constant 0 : index
    %85 = vector.load %arg14[%c0_49, %c0_50] : memref<8x8xf32, #tpu.memory_space<vmem>>, vector<8x8xf32>
    tpu.vector_store %arg14[%c0_49, %c0_50], %35 {strides = array<i32>} : memref<8x8xf32, #tpu.memory_space<vmem>>, vector<8x8xf32>,
    return
  }
  func.func @transform_0(%arg0: i32) -> (i32, i32) {
    %c0_i32 = arith.constant 0 : i32
    %c0_i32_0 = arith.constant 0 : i32
    return %arg0, %c0_i32 : i32, i32
  }
  func.func @transform_1(%arg0: i32) -> (i32, i32) {
    %c0_i32 = arith.constant 0 : i32
    %c0_i32_0 = arith.constant 0 : i32
    return %arg0, %c0_i32 : i32, i32
  }
  func.func @transform_2(%arg0: i32) -> (i32, i32, i32) {
    %c0_i32 = arith.constant 0 : i32
    %c0_i32_0 = arith.constant 0 : i32
    %c0_i32_1 = arith.constant 0 : i32
    return %arg0, %c0_i32, %c0_i32_0 : i32, i32, i32
  }
  func.func @transform_3(%arg0: i32) -> (i32, i32, i32) {
    %c0_i32 = arith.constant 0 : i32
    %c0_i32_0 = arith.constant 0 : i32
    %c0_i32_1 = arith.constant 0 : i32
    return %arg0, %c0_i32, %c0_i32_0 : i32, i32, i32
  }
  func.func @transform_4(%arg0: i32) -> (i32, i32) {
    %c0_i32 = arith.constant 0 : i32
    %c0_i32_0 = arith.constant 0 : i32
    %c0_i32_1 = arith.constant 0 : i32
    return %c0_i32, %c0_i32_0 : i32, i32
  }
  func.func @transform_5(%arg0: i32) -> (i32, i32) {
    %c0_i32 = arith.constant 0 : i32
    %c0_i32_0 = arith.constant 0 : i32
    %c0_i32_1 = arith.constant 0 : i32
    return %c0_i32, %c0_i32_0 : i32, i32
  }
  func.func @transform_6(%arg0: i32) -> (i32, i32) {
    %c0_i32 = arith.constant 0 : i32
    %c0_i32_0 = arith.constant 0 : i32
    %c0_i32_1 = arith.constant 0 : i32
    return %c0_i32, %c0_i32_0 : i32, i32
  }
  func.func @transform_7(%arg0: i32) -> (i32, i32) {
    %c0_i32 = arith.constant 0 : i32
    %c0_i32_0 = arith.constant 0 : i32
    %c0_i32_1 = arith.constant 0 : i32
    return %c0_i32, %c0_i32_0 : i32, i32
  }
  func.func @transform_8(%arg0: i32) -> (i32, i32) {
    %c0_i32 = arith.constant 0 : i32
    %c0_i32_0 = arith.constant 0 : i32
    %c0_i32_1 = arith.constant 0 : i32
    return %c0_i32, %c0_i32_0 : i32, i32
  }
  func.func @transform_9(%arg0: i32) -> (i32, i32) {
    %c0_i32 = arith.constant 0 : i32
    %c0_i32_0 = arith.constant 0 : i32
    %c0_i32_1 = arith.constant 0 : i32
    return %c0_i32, %c0_i32_0 : i32, i32
  }
  func.func @transform_10(%arg0: i32) -> (i32, i32) {
    %c0_i32 = arith.constant 0 : i32
    %c0_i32_0 = arith.constant 0 : i32
    %c0_i32_1 = arith.constant 0 : i32
    return %c0_i32, %c0_i32_0 : i32, i32
  }
  func.func @transform_11(%arg0: i32) -> (i32, i32) {
    %c0_i32 = arith.constant 0 : i32
    %c0_i32_0 = arith.constant 0 : i32
    return %arg0, %c0_i32 : i32, i32
  }
  func.func @transform_12(%arg0: i32) -> (i32, i32) {
    %c0_i32 = arith.constant 0 : i32
    %c0_i32_0 = arith.constant 0 : i32
    return %arg0, %c0_i32 : i32, i32
  }
  func.func @transform_13(%arg0: i32) -> (i32, i32) {
    %c0_i32 = arith.constant 0 : i32
    %c0_i32_0 = arith.constant 0 : i32
    return %arg0, %c0_i32 : i32, i32
  }
}

</mosaic_0001>

<llo_original>
// kernel: decoder_forward.2
$region0: #{decoder_forward.2}
  #allocation0 [shape = 'u32[]', space=smem, size = 0x4, offset = 0x4, fixed_abs, tag = 'smem constant byte address 0x4 - core index']
  #allocation1 [shape = 'u32[144,128]{1,0:T(1,128)}', space=vmem, size = 0x12000, scoped, tag = 'internal scratch']
  %s0 = inlined_call_operand.vmem [shape: bf16[8,8,128], index: 0, kind: input, shape index: {}]
  %s1 = inlined_call_operand.vmem [shape: bf16[128,128], index: 1, kind: input, shape index: {}]
  %s2 = inlined_call_operand.vmem [shape: f32[1,128], index: 2, kind: input, shape index: {}]
  %s3 = inlined_call_operand.vmem [shape: bf16[8,8,128], index: 3, kind: output, shape index: {}]
  %s4 = sld [smem:[#allocation0]]
  $region22: #{decoder_forward.2} parent=0
    _
  %s6 = ssub.s32 1, %s4
  %s7 = scalar_select 0, %s6, %s4
  // Predicated region
  $region2: #{decoder_forward.2} parent=0 // pred_check
    _
  $region3: #{decoder_forward.2} parent=0 // pred_check_branch
    %9 = sbr.rel (0) target = $region5
  $region4: #{decoder_forward.2} parent=0 // pred_region
    _
  $region5: #{decoder_forward.2} parent=0 // pred_fallthru
    _
  // Predicated region
  $region6: #{decoder_forward.2} parent=0 // pred_check
    _
  $region7: #{decoder_forward.2} parent=0 // pred_check_branch
    %11 = sbr.rel (0) target = $region9
  $region8: #{decoder_forward.2} parent=0 // pred_region
    _
  $region9: #{decoder_forward.2} parent=0 // pred_fallthru
    _
  // Predicated region
  $region10: #{decoder_forward.2} parent=0 // pred_check
    _
  $region11: #{decoder_forward.2} parent=0 // pred_check_branch
    %13 = sbr.rel (0) target = $region13
  $region12: #{decoder_forward.2} parent=0 // pred_region
    _
  $region13: #{decoder_forward.2} parent=0 // pred_fallthru
    _
  %v15 = vld [vmem:[%s0] sm:$0xf]
  %v16 = vld [vmem:[%s0 + $0x4] sm:$0xf]
  %v17 = vld [vmem:[%s0 + $0x8] sm:$0xf]
  %v18 = vld [vmem:[%s0 + $0xc] sm:$0xf]
  %v19 = vld [vmem:[%s0 + $0x10] sm:$0xf]
  %v20 = vld [vmem:[%s0 + $0x14] sm:$0xf]
  %v21 = vld [vmem:[%s0 + $0x18] sm:$0xf]
  %v22 = vld [vmem:[%s0 + $0x1c] sm:$0xf]
  %v23 = vld [vmem:[%s1] sm:$0xf]
  %v24 = vld [vmem:[%s1 + $0x4] sm:$0xf]
  %v25 = vld [vmem:[%s1 + $0x8] sm:$0xf]
  %v26 = vld [vmem:[%s1 + $0xc] sm:$0xf]
  %v27 = vld [vmem:[%s1 + $0x10] sm:$0xf]
  %v28 = vld [vmem:[%s1 + $0x14] sm:$0xf]
  %v29 = vld [vmem:[%s1 + $0x18] sm:$0xf]
  %v30 = vld [vmem:[%s1 + $0x1c] sm:$0xf]
  %v31 = vld [vmem:[%s1 + $0x20] sm:$0xf]
  %v32 = vld [vmem:[%s1 + $0x24] sm:$0xf]
  %v33 = vld [vmem:[%s1 + $0x28] sm:$0xf]
  %v34 = vld [vmem:[%s1 + $0x2c] sm:$0xf]
  %v35 = vld [vmem:[%s1 + $0x30] sm:$0xf]
  %v36 = vld [vmem:[%s1 + $0x34] sm:$0xf]
  %v37 = vld [vmem:[%s1 + $0x38] sm:$0xf]
  %v38 = vld [vmem:[%s1 + $0x3c] sm:$0xf]
  %v39 = vld [vmem:[%s2] sm:$0x1]
  %v41 = vlaneseq
  %v42 = vshrl.u32 %v41, 7
  %v43 = vsub.s32 0, %v42
  %v44 = vrot.slane %v39, %v43
  %v54 = vunpack.c.l.b16 %v15
  %v55 = vunpack.c.l.b16 %v16
  %v56 = vunpack.c.l.b16 %v17
  %v57 = vunpack.c.l.b16 %v18
  %v58 = vunpack.c.l.b16 %v19
  %v59 = vunpack.c.l.b16 %v20
  %v60 = vunpack.c.l.b16 %v21
  %v61 = vunpack.c.l.b16 %v22
  %v62 = vpack.c.b16 %v55, %v54
  %v63 = vpack.c.b16 %v57, %v56
  %v64 = vpack.c.b16 %v59, %v58
  %v65 = vpack.c.b16 %v61, %v60
  %v86 = vunpack.c.l.b16 %v23
  %v87 = vunpack.c.l.b16 %v24
  %v88 = vunpack.c.l.b16 %v25
  %v89 = vunpack.c.l.b16 %v26
  %v90 = vunpack.c.l.b16 %v27
  %v91 = vunpack.c.l.b16 %v28
  %v92 = vunpack.c.l.b16 %v29
  %v93 = vunpack.c.l.b16 %v30
  %v94 = vunpack.c.l.b16 %v31
  %v95 = vunpack.c.l.b16 %v32
  %v96 = vunpack.c.l.b16 %v33
  %v97 = vunpack.c.l.b16 %v34
  %v98 = vunpack.c.l.b16 %v35
  %v99 = vunpack.c.l.b16 %v36
  %v100 = vunpack.c.l.b16 %v37
  %v101 = vunpack.c.l.b16 %v38
  %v102 = vpack.c.b16 %v87, %v86
  %v103 = vpack.c.b16 %v89, %v88
  %v104 = vpack.c.b16 %v91, %v90
  %v105 = vpack.c.b16 %v93, %v92
  %v106 = vpack.c.b16 %v95, %v94
  %v107 = vpack.c.b16 %v97, %v96
  %v108 = vpack.c.b16 %v99, %v98
  %v109 = vpack.c.b16 %v101, %v100
  %118 = vmatprep.subr.bf16.mxu0 0
  %119 = vmatpush1.bf16.msra.mxu0 %v102
  %120 = vmatprep.subr.bf16.mxu0 0
  %121 = vmatpush1.bf16.msra.mxu0 %v103
  %122 = vmatprep.subr.bf16.mxu0 0
  %123 = vmatpush1.bf16.msra.mxu0 %v104
  %124 = vmatprep.subr.bf16.mxu0 0
  %125 = vmatpush1.bf16.msra.mxu0 %v105
  %126 = vmatprep.subr.bf16.mxu0 0
  %127 = vmatpush1.bf16.msra.mxu0 %v106
  %128 = vmatprep.subr.bf16.mxu0 0
  %129 = vmatpush1.bf16.msra.mxu0 %v107
  %130 = vmatprep.subr.bf16.mxu0 0
  %131 = vmatpush1.bf16.msra.mxu0 %v108
  %132 = vmatprep.subr.bf16.mxu0 0
  %133 = vmatpush1.bf16.msra.mxu0 %v109
  %134 = vmatprep.subr.bf16.mxu0 0
  %135 = vmatpush1.bf16.msra.mxu0 0
  %136 = vmatprep.subr.bf16.mxu0 0
  %137 = vmatpush1.bf16.msra.mxu0 0
  %138 = vmatprep.subr.bf16.mxu0 0
  %139 = vmatpush1.bf16.msra.mxu0 0
  %140 = vmatprep.subr.bf16.mxu0 0
  %141 = vmatpush1.bf16.msra.mxu0 0
  %142 = vmatprep.subr.bf16.mxu0 0
  %143 = vmatpush1.bf16.msra.mxu0 0
  %144 = vmatprep.subr.bf16.mxu0 0
  %145 = vmatpush1.bf16.msra.mxu0 0
  %146 = vmatprep.subr.bf16.mxu0 0
  %147 = vmatpush1.bf16.msra.mxu0 0
  %148 = vmatprep.subr.bf16.mxu0 0
  %149 = vmatpush1.bf16.msra.mxu0 0
  %150 = vmatprep.mubr.bf16.mxu0 0
  %151 = vmatmul.mubr.bf16.gmra.mrb[0].mxu0 %v62
  %v152 = vpop.f32.mrb[0].mxu0
  %v153 = vadd.f32 %v44, %v152
  %v154 = vpop.f32.mrb[0].mxu0
  %v155 = vpop.f32.mrb[0].mxu0
  %v156 = vadd.f32 %v44, %v155
  %v157 = vpop.f32.mrb[0].mxu0
  %158 = vmatprep.mubr.bf16.mxu0 0
  %159 = vmatmul.mubr.bf16.gmra.mrb[0].mxu0 %v63
  %v160 = vpop.f32.mrb[0].mxu0
  %v161 = vadd.f32 %v44, %v160
  %v162 = vpop.f32.mrb[0].mxu0
  %v163 = vpop.f32.mrb[0].mxu0
  %v164 = vadd.f32 %v44, %v163
  %v165 = vpop.f32.mrb[0].mxu0
  %166 = vmatprep.mubr.bf16.mxu0 0
  %167 = vmatmul.mubr.bf16.gmra.mrb[0].mxu0 %v64
  %v168 = vpop.f32.mrb[0].mxu0
  %v169 = vadd.f32 %v44, %v168
  %v170 = vpop.f32.mrb[0].mxu0
  %v171 = vpop.f32.mrb[0].mxu0
  %v172 = vadd.f32 %v44, %v171
  %v173 = vpop.f32.mrb[0].mxu0
  %174 = vmatprep.mubr.bf16.mxu0 0
  %175 = vmatmul.mubr.bf16.gmra.mrb[0].mxu0 %v65
  %v176 = vpop.f32.mrb[0].mxu0
  %v177 = vadd.f32 %v44, %v176
  %v178 = vpop.f32.mrb[0].mxu0
  %v179 = vpop.f32.mrb[0].mxu0
  %v180 = vadd.f32 %v44, %v179
  %v181 = vpop.f32.mrb[0].mxu0
  %182 = vdwg.mxu0
  %v183 = vpack.c.bf16 %v153, %v153
  %v184 = vpack.c.bf16 %v156, %v156
  %v185 = vpack.c.bf16 %v161, %v161
  %v186 = vpack.c.bf16 %v164, %v164
  %v187 = vpack.c.bf16 %v169, %v169
  %v188 = vpack.c.bf16 %v172, %v172
  %v189 = vpack.c.bf16 %v177, %v177
  %v190 = vpack.c.bf16 %v180, %v180
  %191 = vst [vmem:[%s3] sm:$0xf] %v183
  %192 = vst [vmem:[%s3 + $0x4] sm:$0xf] %v184
  %193 = vst [vmem:[%s3 + $0x8] sm:$0xf] %v185
  %194 = vst [vmem:[%s3 + $0xc] sm:$0xf] %v186
  %195 = vst [vmem:[%s3 + $0x10] sm:$0xf] %v187
  %196 = vst [vmem:[%s3 + $0x14] sm:$0xf] %v188
  %197 = vst [vmem:[%s3 + $0x18] sm:$0xf] %v189
  %198 = vst [vmem:[%s3 + $0x1c] sm:$0xf] %v190
  // Predicated region
  $region14: #{decoder_forward.2} parent=0 // pred_check
    _
  $region15: #{decoder_forward.2} parent=0 // pred_check_branch
    %200 = sbr.rel (0) target = $region17
  $region16: #{decoder_forward.2} parent=0 // pred_region
    _
  $region17: #{decoder_forward.2} parent=0 // pred_fallthru
    _
  // Predicated region
  $region18: #{decoder_forward.2} parent=0 // pred_check
    _
  $region19: #{decoder_forward.2} parent=0 // pred_check_branch
    %202 = sbr.rel (0) target = $region21
  $region20: #{decoder_forward.2} parent=0 // pred_region
    _
  $region21: #{decoder_forward.2} parent=0 // pred_fallthru
    _

// kernel: decoder_forward.3
$region0: #{decoder_forward.3}
  #allocation0 [shape = 'u32[]', space=smem, size = 0x4, offset = 0x4, fixed_abs, tag = 'smem constant byte address 0x4 - core index']
  #allocation1 [shape = 'u32[144,128]{1,0:T(1,128)}', space=vmem, size = 0x12000, scoped, tag = 'internal scratch']
  #allocation2 [shape = 'f32[8,256]{1,0:T(8,128)}', space=vmem, size = 0x2000, scoped, tag = 'scratch operand']
  #allocation3 [shape = 'f32[8,384]{1,0:T(8,128)}', space=vmem, size = 0x3000, scoped, tag = 'scratch operand']
  %s0 = inlined_call_operand.vmem [shape: f32[8,128], index: 0, kind: input, shape index: {}]
  %s1 = inlined_call_operand.vmem [shape: f32[8,128], index: 1, kind: input, shape index: {}, may-alias: {1,12}]
  %s2 = inlined_call_operand.vmem [shape: bf16[8,8,128], index: 2, kind: input, shape index: {}]
  %s3 = inlined_call_operand.vmem [shape: bf16[8,8,128], index: 3, kind: input, shape index: {}]
  %s4 = inlined_call_operand.hbm [shape: f32[128,512], index: 4, kind: input, shape index: {}]
  %s5 = inlined_call_operand.vmem [shape: f32[1,512], index: 5, kind: input, shape index: {}]
  %s6 = inlined_call_operand.vmem [shape: f32[1,128], index: 6, kind: input, shape index: {}]
  %s7 = inlined_call_operand.hbm [shape: f32[256,384], index: 7, kind: input, shape index: {}]
  %s8 = inlined_call_operand.vmem [shape: f32[1,384], index: 8, kind: input, shape index: {}]
  %s9 = inlined_call_operand.hbm [shape: f32[384,128], index: 9, kind: input, shape index: {}]
  %s10 = inlined_call_operand.vmem [shape: f32[1,128], index: 10, kind: input, shape index: {}]
  %s11 = inlined_call_operand.vmem [shape: f32[8,128], index: 11, kind: output, shape index: {0}]
  %s12 = inlined_call_operand.vmem [shape: f32[8,128], index: 12, kind: output, shape index: {1}, may-alias: {1,12}]
  %s13 = inlined_call_operand.vmem [shape: f32[8,8], index: 13, kind: output, shape index: {2}]
  %14 = xla_tuple %s11, %s12, %s13
  %s15 = sld [smem:[#allocation0]]
  $region82: #{decoder_forward.3} parent=0
    _
  %s17 = ssub.s32 1, %s15
  %s18 = scalar_select 0, %s17, %s15
  $region1: #{decoder_forward.3} parent=0
    #allocation4 [shape = 'u8[262144]{0}', space=vmem, size = 0x40000, scoped, tag = 'input window, operand 4, single buffered']
    #allocation5 [shape = 's32[1]{0}', space=sflag, size = 0x4, scoped, tag = 'scoped memory for decoder_forward.3']
    #allocation6 [shape = 'u8[393216]{0}', space=vmem, size = 0x60000, scoped, tag = 'input window, operand 7, single buffered']
    #allocation7 [shape = 's32[1]{0}', space=sflag, size = 0x4, scoped, tag = 'scoped memory for decoder_forward.3']
    #allocation8 [shape = 'u8[196608]{0}', space=vmem, size = 0x30000, scoped, tag = 'input window, operand 9, single buffered']
    %19 = vsyncpa [#allocation5], 0
    %20 = vsyncpa [#allocation7], 0
    // Predicated region
    $region2: #{decoder_forward.3} parent=1 // pred_check
      _
    $region3: #{decoder_forward.3} parent=1 // pred_check_branch
      %22 = sbr.rel (0) target = $region5
    $region4: #{decoder_forward.3} parent=1 // pred_region
      _
    $region5: #{decoder_forward.3} parent=1 // pred_fallthru
      _
    // Predicated region
    $region6: #{decoder_forward.3} parent=1 // pred_check
      _
    $region7: #{decoder_forward.3} parent=1 // pred_check_branch
      %24 = sbr.rel (0) target = $region9
    $region8: #{decoder_forward.3} parent=1 // pred_region
      _
    $region9: #{decoder_forward.3} parent=1 // pred_fallthru
      _
    // Predicated region
    $region10: #{decoder_forward.3} parent=1 // pred_check
      _
    $region11: #{decoder_forward.3} parent=1 // pred_check_branch
      %26 = sbr.rel (0) target = $region13
    $region12: #{decoder_forward.3} parent=1 // pred_region
      _
    $region13: #{decoder_forward.3} parent=1 // pred_fallthru
      _
    // Predicated region
    $region14: #{decoder_forward.3} parent=1 // pred_check
      _
    $region15: #{decoder_forward.3} parent=1 // pred_check_branch
      %28 = sbr.rel (0) target = $region17
    $region16: #{decoder_forward.3} parent=1 // pred_region
      _
    $region17: #{decoder_forward.3} parent=1 // pred_fallthru
      _
    // Predicated region
    $region18: #{decoder_forward.3} parent=1 // pred_check
      _
    $region19: #{decoder_forward.3} parent=1 // pred_check_branch
      %30 = sbr.rel (0) target = $region21
    $region20: #{decoder_forward.3} parent=1 // pred_region
      %s32 = ssub.s32 8192, 8192
      %33 = vsyncadd [#allocation5], %s32
      %s34 = sshll.u32 [#allocation4], 4
      %s35 = int_to_ptr.vmem [resolvable:$true] %s34
      %40 = dma.hbm_to_vmem [thread:$0]  %s4, 8192, %s35, [#allocation5], 512, 512, 32
    $region21: #{decoder_forward.3} parent=1 // pred_fallthru
      _
    // Predicated region
    $region22: #{decoder_forward.3} parent=1 // pred_check
      _
    $region23: #{decoder_forward.3} parent=1 // pred_check_branch
      %42 = sbr.rel (0) target = $region25
    $region24: #{decoder_forward.3} parent=1 // pred_region
      _
    $region25: #{decoder_forward.3} parent=1 // pred_fallthru
      _
    // Predicated region
    $region26: #{decoder_forward.3} parent=1 // pred_check
      _
    $region27: #{decoder_forward.3} parent=1 // pred_check_branch
      %44 = sbr.rel (0) target = $region29
    $region28: #{decoder_forward.3} parent=1 // pred_region
      _
    $region29: #{decoder_forward.3} parent=1 // pred_fallthru
      _
    // Predicated region
    $region30: #{decoder_forward.3} parent=1 // pred_check
      _
    $region31: #{decoder_forward.3} parent=1 // pred_check_branch
      %46 = sbr.rel (0) target = $region33
    $region32: #{decoder_forward.3} parent=1 // pred_region
      %s48 = ssub.s32 12288, 12288
      %49 = vsyncadd [#allocation7], %s48
      %s50 = sshll.u32 [#allocation6], 4
      %s51 = int_to_ptr.vmem [resolvable:$true] %s50
      %56 = dma.hbm_to_vmem [thread:$0]  %s7, 12288, %s51, [#allocation7], 384, 384, 24
    $region33: #{decoder_forward.3} parent=1 // pred_fallthru
      _
    // Predicated region
    $region34: #{decoder_forward.3} parent=1 // pred_check
      _
    $region35: #{decoder_forward.3} parent=1 // pred_check_branch
      %58 = sbr.rel (0) target = $region37
    $region36: #{decoder_forward.3} parent=1 // pred_region
      _
    $region37: #{decoder_forward.3} parent=1 // pred_fallthru
      _
    // Predicated region
    $region38: #{decoder_forward.3} parent=1 // pred_check
      _
    $region39: #{decoder_forward.3} parent=1 // pred_check_branch
      %60 = sbr.rel (0) target = $region41
    $region40: #{decoder_forward.3} parent=1 // pred_region
      %s62 = ssub.s32 6144, 6144
      %63 = vsyncadd [#allocation7], %s62
      %s64 = sshll.u32 [#allocation8], 4
      %s65 = int_to_ptr.vmem [resolvable:$true] %s64
      %70 = dma.hbm_to_vmem [thread:$0]  %s9, 6144, %s65, [#allocation7], 128, 128, 8
    $region41: #{decoder_forward.3} parent=1 // pred_fallthru
      _
    // Predicated region
    $region42: #{decoder_forward.3} parent=1 // pred_check
      _
    $region43: #{decoder_forward.3} parent=1 // pred_check_branch
      %72 = sbr.rel (0) target = $region45
    $region44: #{decoder_forward.3} parent=1 // pred_region
      _
    $region45: #{decoder_forward.3} parent=1 // pred_fallthru
      _
    // Predicated region
    $region46: #{decoder_forward.3} parent=1 // pred_check
      _
    $region47: #{decoder_forward.3} parent=1 // pred_check_branch
      %74 = sbr.rel (0) target = $region49
    $region48: #{decoder_forward.3} parent=1 // pred_region
      %75 = dma.done [#allocation5], 8192
    $region49: #{decoder_forward.3} parent=1 // pred_fallthru
      _
    // Predicated region
    $region50: #{decoder_forward.3} parent=1 // pred_check
      _
    $region51: #{decoder_forward.3} parent=1 // pred_check_branch
      %77 = sbr.rel (0) target = $region53
    $region52: #{decoder_forward.3} parent=1 // pred_region
      %78 = dma.done [#allocation7], 12288
    $region53: #{decoder_forward.3} parent=1 // pred_fallthru
      _
    // Predicated region
    $region54: #{decoder_forward.3} parent=1 // pred_check
      _
    $region55: #{decoder_forward.3} parent=1 // pred_check_branch
      %80 = sbr.rel (0) target = $region57
    $region56: #{decoder_forward.3} parent=1 // pred_region
      %81 = dma.done [#allocation7], 6144
    $region57: #{decoder_forward.3} parent=1 // pred_fallthru
      _
    %v82 = vld [vmem:[%s0] sm:$0xff]
    %v83 = vld [vmem:[%s1] sm:$0xff]
    %v84 = vld [vmem:[%s2] sm:$0xf]
    %v85 = vld [vmem:[%s2 + $0x4] sm:$0xf]
    %v86 = vld [vmem:[%s2 + $0x8] sm:$0xf]
    %v87 = vld [vmem:[%s2 + $0xc] sm:$0xf]
    %v88 = vld [vmem:[%s2 + $0x10] sm:$0xf]
    %v89 = vld [vmem:[%s2 + $0x14] sm:$0xf]
    %v90 = vld [vmem:[%s2 + $0x18] sm:$0xf]
    %v91 = vld [vmem:[%s2 + $0x1c] sm:$0xf]
    %v92 = vunpack.c.l.bf16 %v84
    %v93 = vunpack.c.l.bf16 %v85
    %v94 = vunpack.c.l.bf16 %v86
    %v95 = vunpack.c.l.bf16 %v87
    %v96 = vunpack.c.l.bf16 %v88
    %v97 = vunpack.c.l.bf16 %v89
    %v98 = vunpack.c.l.bf16 %v90
    %v99 = vunpack.c.l.bf16 %v91
    %v100 = vld [vmem:[%s3] sm:$0xf]
    %v101 = vld [vmem:[%s3 + $0x4] sm:$0xf]
    %v102 = vld [vmem:[%s3 + $0x8] sm:$0xf]
    %v103 = vld [vmem:[%s3 + $0xc] sm:$0xf]
    %v104 = vld [vmem:[%s3 + $0x10] sm:$0xf]
    %v105 = vld [vmem:[%s3 + $0x14] sm:$0xf]
    %v106 = vld [vmem:[%s3 + $0x18] sm:$0xf]
    %v107 = vld [vmem:[%s3 + $0x1c] sm:$0xf]
    %v108 = vunpack.c.l.bf16 %v100
    %v109 = vunpack.c.l.bf16 %v101
    %v110 = vunpack.c.l.bf16 %v102
    %v111 = vunpack.c.l.bf16 %v103
    %v112 = vunpack.c.l.bf16 %v104
    %v113 = vunpack.c.l.bf16 %v105
    %v114 = vunpack.c.l.bf16 %v106
    %v115 = vunpack.c.l.bf16 %v107
    %v116 = vld [vmem:[#allocation4] sm:$0xff]
    %v117 = vld [vmem:[#allocation4 + $0x8] sm:$0xff]
    %v118 = vld [vmem:[#allocation4 + $0x10] sm:$0xff]
    %v119 = vld [vmem:[#allocation4 + $0x18] sm:$0xff]
    %v120 = vld [vmem:[#allocation4 + $0x20] sm:$0xff]
    %v121 = vld [vmem:[#allocation4 + $0x28] sm:$0xff]
    %v122 = vld [vmem:[#allocation4 + $0x30] sm:$0xff]
    %v123 = vld [vmem:[#allocation4 + $0x38] sm:$0xff]
    %v124 = vld [vmem:[#allocation4 + $0x40] sm:$0xff]
    %v125 = vld [vmem:[#allocation4 + $0x48] sm:$0xff]
    %v126 = vld [vmem:[#allocation4 + $0x50] sm:$0xff]
    %v127 = vld [vmem:[#allocation4 + $0x58] sm:$0xff]
    %v128 = vld [vmem:[#allocation4 + $0x60] sm:$0xff]
    %v129 = vld [vmem:[#allocation4 + $0x68] sm:$0xff]
    %v130 = vld [vmem:[#allocation4 + $0x70] sm:$0xff]
    %v131 = vld [vmem:[#allocation4 + $0x78] sm:$0xff]
    %v132 = vld [vmem:[#allocation4 + $0x80] sm:$0xff]
    %v133 = vld [vmem:[#allocation4 + $0x88] sm:$0xff]
    %v134 = vld [vmem:[#allocation4 + $0x90] sm:$0xff]
    %v135 = vld [vmem:[#allocation4 + $0x98] sm:$0xff]
    %v136 = vld [vmem:[#allocation4 + $0xa0] sm:$0xff]
    %v137 = vld [vmem:[#allocation4 + $0xa8] sm:$0xff]
    %v138 = vld [vmem:[#allocation4 + $0xb0] sm:$0xff]
    %v139 = vld [vmem:[#allocation4 + $0xb8] sm:$0xff]
    %v140 = vld [vmem:[#allocation4 + $0xc0] sm:$0xff]
    %v141 = vld [vmem:[#allocation4 + $0xc8] sm:$0xff]
    %v142 = vld [vmem:[#allocation4 + $0xd0] sm:$0xff]
    %v143 = vld [vmem:[#allocation4 + $0xd8] sm:$0xff]
    %v144 = vld [vmem:[#allocation4 + $0xe0] sm:$0xff]
    %v145 = vld [vmem:[#allocation4 + $0xe8] sm:$0xff]
    %v146 = vld [vmem:[#allocation4 + $0xf0] sm:$0xff]
    %v147 = vld [vmem:[#allocation4 + $0xf8] sm:$0xff]
    %v148 = vld [vmem:[#allocation4 + $0x100] sm:$0xff]
    %v149 = vld [vmem:[#allocation4 + $0x108] sm:$0xff]
    %v150 = vld [vmem:[#allocation4 + $0x110] sm:$0xff]
    %v151 = vld [vmem:[#allocation4 + $0x118] sm:$0xff]
    %v152 = vld [vmem:[#allocation4 + $0x120] sm:$0xff]
    %v153 = vld [vmem:[#allocation4 + $0x128] sm:$0xff]
    %v154 = vld [vmem:[#allocation4 + $0x130] sm:$0xff]
    %v155 = vld [vmem:[#allocation4 + $0x138] sm:$0xff]
    %v156 = vld [vmem:[#allocation4 + $0x140] sm:$0xff]
    %v157 = vld [vmem:[#allocation4 + $0x148] sm:$0xff]
    %v158 = vld [vmem:[#allocation4 + $0x150] sm:$0xff]
    %v159 = vld [vmem:[#allocation4 + $0x158] sm:$0xff]
    %v160 = vld [vmem:[#allocation4 + $0x160] sm:$0xff]
    %v161 = vld [vmem:[#allocation4 + $0x168] sm:$0xff]
    %v162 = vld [vmem:[#allocation4 + $0x170] sm:$0xff]
    %v163 = vld [vmem:[#allocation4 + $0x178] sm:$0xff]
    %v164 = vld [vmem:[#allocation4 + $0x180] sm:$0xff]
    %v165 = vld [vmem:[#allocation4 + $0x188] sm:$0xff]
    %v166 = vld [vmem:[#allocation4 + $0x190] sm:$0xff]
    %v167 = vld [vmem:[#allocation4 + $0x198] sm:$0xff]
    %v168 = vld [vmem:[#allocation4 + $0x1a0] sm:$0xff]
    %v169 = vld [vmem:[#allocation4 + $0x1a8] sm:$0xff]
    %v170 = vld [vmem:[#allocation4 + $0x1b0] sm:$0xff]
    %v171 = vld [vmem:[#allocation4 + $0x1b8] sm:$0xff]
    %v172 = vld [vmem:[#allocation4 + $0x1c0] sm:$0xff]
    %v173 = vld [vmem:[#allocation4 + $0x1c8] sm:$0xff]
    %v174 = vld [vmem:[#allocation4 + $0x1d0] sm:$0xff]
    %v175 = vld [vmem:[#allocation4 + $0x1d8] sm:$0xff]
    %v176 = vld [vmem:[#allocation4 + $0x1e0] sm:$0xff]
    %v177 = vld [vmem:[#allocation4 + $0x1e8] sm:$0xff]
    %v178 = vld [vmem:[#allocation4 + $0x1f0] sm:$0xff]
    %v179 = vld [vmem:[#allocation4 + $0x1f8] sm:$0xff]
    %v180 = vld [vmem:[%s5] sm:$0xf]
    %v182 = vlaneseq
    %v183 = vshrl.u32 %v182, 7
    %v184 = vsub.s32 0, %v183
    %v185 = vrot.slane %v180, %v184
    %v186 = vlaneseq
    %v187 = vshrl.u32 %v186, 7
    %v188 = vsub.s32 1, %v187
    %v189 = vrot.slane %v180, %v188
    %v190 = vlaneseq
    %v191 = vshrl.u32 %v190, 7
    %v192 = vsub.s32 2, %v191
    %v193 = vrot.slane %v180, %v192
    %v194 = vlaneseq
    %v195 = vshrl.u32 %v194, 7
    %v196 = vsub.s32 3, %v195
    %v197 = vrot.slane %v180, %v196
    %202 = vmatprep.subr.mxu0 %v117
    %203 = vmatpush1.msra.mxu0 %v116
    %204 = vmatprep.subr.mxu0 %v121
    %205 = vmatpush1.msra.mxu0 %v120
    %206 = vmatprep.subr.mxu0 %v125
    %207 = vmatpush1.msra.mxu0 %v124
    %208 = vmatprep.subr.mxu0 %v129
    %209 = vmatpush1.msra.mxu0 %v128
    %210 = vmatprep.subr.mxu0 %v133
    %211 = vmatpush1.msra.mxu0 %v132
    %212 = vmatprep.subr.mxu0 %v137
    %213 = vmatpush1.msra.mxu0 %v136
    %214 = vmatprep.subr.mxu0 %v141
    %215 = vmatpush1.msra.mxu0 %v140
    %216 = vmatprep.subr.mxu0 %v145
    %217 = vmatpush1.msra.mxu0 %v144
    %218 = vmatprep.subr.mxu0 %v149
    %219 = vmatpush1.msra.mxu0 %v148
    %220 = vmatprep.subr.mxu0 %v153
    %221 = vmatpush1.msra.mxu0 %v152
    %222 = vmatprep.subr.mxu0 %v157
    %223 = vmatpush1.msra.mxu0 %v156
    %224 = vmatprep.subr.mxu0 %v161
    %225 = vmatpush1.msra.mxu0 %v160
    %226 = vmatprep.subr.mxu0 %v165
    %227 = vmatpush1.msra.mxu0 %v164
    %228 = vmatprep.subr.mxu0 %v169
    %229 = vmatpush1.msra.mxu0 %v168
    %230 = vmatprep.subr.mxu0 %v173
    %231 = vmatpush1.msra.mxu0 %v172
    %232 = vmatprep.subr.mxu0 %v177
    %233 = vmatpush1.msra.mxu0 %v176
    %234 = vmatprep.subr.mxu0 0.0
    %235 = vmatpush1.msra.mxu0 0.0
    %236 = vmatprep.subr.mxu0 0.0
    %237 = vmatpush1.msra.mxu0 0.0
    %238 = vmatprep.subr.mxu0 0.0
    %239 = vmatpush1.msra.mxu0 0.0
    %240 = vmatprep.subr.mxu0 0.0
    %241 = vmatpush1.msra.mxu0 0.0
    %242 = vmatprep.subr.mxu0 0.0
    %243 = vmatpush1.msra.mxu0 0.0
    %244 = vmatprep.subr.mxu0 0.0
    %245 = vmatpush1.msra.mxu0 0.0
    %246 = vmatprep.subr.mxu0 0.0
    %247 = vmatpush1.msra.mxu0 0.0
    %248 = vmatprep.subr.mxu0 0.0
    %249 = vmatpush1.msra.mxu0 0.0
    %250 = vmatprep.subr.mxu0 0.0
    %251 = vmatpush1.msra.mxu0 0.0
    %252 = vmatprep.subr.mxu0 0.0
    %253 = vmatpush1.msra.mxu0 0.0
    %254 = vmatprep.subr.mxu0 0.0
    %255 = vmatpush1.msra.mxu0 0.0
    %256 = vmatprep.subr.mxu0 0.0
    %257 = vmatpush1.msra.mxu0 0.0
    %258 = vmatprep.subr.mxu0 0.0
    %259 = vmatpush1.msra.mxu0 0.0
    %260 = vmatprep.subr.mxu0 0.0
    %261 = vmatpush1.msra.mxu0 0.0
    %262 = vmatprep.subr.mxu0 0.0
    %263 = vmatpush1.msra.mxu0 0.0
    %264 = vmatprep.subr.mxu0 0.0
    %265 = vmatpush1.msra.mxu0 0.0
    %266 = vmatprep.mubr.f32.mxu0 0.0
    %267 = vmatmul.mubr.f32.gmra.mrb[0].mxu0 %v83
    %v268 = vpop.f32.mrb[0].mxu0
    %v269 = vadd.f32 %v185, %v268
    %v270 = vpop.f32.mrb[0].mxu0
    %v271 = vadd.f32 %v189, %v270
    %272 = vdwg.mxu0
    %273 = vmatprep.subr.mxu0 %v119
    %274 = vmatpush1.msra.mxu0 %v118
    %275 = vmatprep.subr.mxu0 %v123
    %276 = vmatpush1.msra.mxu0 %v122
    %277 = vmatprep.subr.mxu0 %v127
    %278 = vmatpush1.msra.mxu0 %v126
    %279 = vmatprep.subr.mxu0 %v131
    %280 = vmatpush1.msra.mxu0 %v130
    %281 = vmatprep.subr.mxu0 %v135
    %282 = vmatpush1.msra.mxu0 %v134
    %283 = vmatprep.subr.mxu0 %v139
    %284 = vmatpush1.msra.mxu0 %v138
    %285 = vmatprep.subr.mxu0 %v143
    %286 = vmatpush1.msra.mxu0 %v142
    %287 = vmatprep.subr.mxu0 %v147
    %288 = vmatpush1.msra.mxu0 %v146
    %289 = vmatprep.subr.mxu0 %v151
    %290 = vmatpush1.msra.mxu0 %v150
    %291 = vmatprep.subr.mxu0 %v155
    %292 = vmatpush1.msra.mxu0 %v154
    %293 = vmatprep.subr.mxu0 %v159
    %294 = vmatpush1.msra.mxu0 %v158
    %295 = vmatprep.subr.mxu0 %v163
    %296 = vmatpush1.msra.mxu0 %v162
    %297 = vmatprep.subr.mxu0 %v167
    %298 = vmatpush1.msra.mxu0 %v166
    %299 = vmatprep.subr.mxu0 %v171
    %300 = vmatpush1.msra.mxu0 %v170
    %301 = vmatprep.subr.mxu0 %v175
    %302 = vmatpush1.msra.mxu0 %v174
    %303 = vmatprep.subr.mxu0 %v179
    %304 = vmatpush1.msra.mxu0 %v178
    %305 = vmatprep.subr.mxu0 0.0
    %306 = vmatpush1.msra.mxu0 0.0
    %307 = vmatprep.subr.mxu0 0.0
    %308 = vmatpush1.msra.mxu0 0.0
    %309 = vmatprep.subr.mxu0 0.0
    %310 = vmatpush1.msra.mxu0 0.0
    %311 = vmatprep.subr.mxu0 0.0
    %312 = vmatpush1.msra.mxu0 0.0
    %313 = vmatprep.subr.mxu0 0.0
    %314 = vmatpush1.msra.mxu0 0.0
    %315 = vmatprep.subr.mxu0 0.0
    %316 = vmatpush1.msra.mxu0 0.0
    %317 = vmatprep.subr.mxu0 0.0
    %318 = vmatpush1.msra.mxu0 0.0
    %319 = vmatprep.subr.mxu0 0.0
    %320 = vmatpush1.msra.mxu0 0.0
    %321 = vmatprep.subr.mxu0 0.0
    %322 = vmatpush1.msra.mxu0 0.0
    %323 = vmatprep.subr.mxu0 0.0
    %324 = vmatpush1.msra.mxu0 0.0
    %325 = vmatprep.subr.mxu0 0.0
    %326 = vmatpush1.msra.mxu0 0.0
    %327 = vmatprep.subr.mxu0 0.0
    %328 = vmatpush1.msra.mxu0 0.0
    %329 = vmatprep.subr.mxu0 0.0
    %330 = vmatpush1.msra.mxu0 0.0
    %331 = vmatprep.subr.mxu0 0.0
    %332 = vmatpush1.msra.mxu0 0.0
    %333 = vmatprep.subr.mxu0 0.0
    %334 = vmatpush1.msra.mxu0 0.0
    %335 = vmatprep.subr.mxu0 0.0
    %336 = vmatpush1.msra.mxu0 0.0
    %337 = vmatprep.mubr.f32.mxu0 0.0
    %338 = vmatmul.mubr.f32.gmra.mrb[0].mxu0 %v83
    %v339 = vpop.f32.mrb[0].mxu0
    %v340 = vadd.f32 %v193, %v339
    %v341 = vpop.f32.mrb[0].mxu0
    %v342 = vadd.f32 %v197, %v341
    %343 = vdwg.mxu0
    %v345 = vcombine.high %v269, %v269
    %v347 = vunpack.c.l.s4 1966171168
    %v348 = vunpack.c.0.s8 %v347
    %v349 = vlaneseq
    %v350 = vshrl.u32 %v349, 7
    %v351 = vsub.s32 %v348, %v350
    %v352 = vrot.slane %v269, %v351
    %v354 = vunpack.c.l.s4 1966171168
    %v355 = vunpack.c.0.s8 %v354
    %v356 = vlaneseq
    %v357 = vshrl.u32 %v356, 7
    %v358 = vsub.s32 %v355, %v357
    %v359 = vrot.slane %v345, %v358
    %v360 = vcombine.high %v352, %v352
    %v361 = vcombine.high %v359, %v359
    %v363 = vunpack.c.l.s4 1966171168
    %v364 = vunpack.c.0.s8 %v363
    %v365 = vlaneseq
    %v366 = vshrl.u32 %v365, 7
    %v367 = vsub.s32 %v364, %v366
    %v368 = vrot.slane %v352, %v367
    %v370 = vunpack.c.l.s4 1966171168
    %v371 = vunpack.c.0.s8 %v370
    %v372 = vlaneseq
    %v373 = vshrl.u32 %v372, 7
    %v374 = vsub.s32 %v371, %v373
    %v375 = vrot.slane %v359, %v374
    %v377 = vunpack.c.l.s4 1966171168
    %v378 = vunpack.c.0.s8 %v377
    %v379 = vlaneseq
    %v380 = vshrl.u32 %v379, 7
    %v381 = vsub.s32 %v378, %v380
    %v382 = vrot.slane %v360, %v381
    %v384 = vunpack.c.l.s4 1966171168
    %v385 = vunpack.c.0.s8 %v384
    %v386 = vlaneseq
    %v387 = vshrl.u32 %v386, 7
    %v388 = vsub.s32 %v385, %v387
    %v389 = vrot.slane %v361, %v388
    %v390 = vcombine.high %v368, %v368
    %v391 = vcombine.high %v375, %v375
    %v392 = vcombine.high %v382, %v382
    %v393 = vcombine.high %v389, %v389
    %v394 = vlaneseq
    %v395 = vshrl.u32 %v394, 7
    %v396 = vsub.s32 0, %v395
    %v397 = vrot.slane %v368, %v396
    %v398 = vlaneseq
    %v399 = vshrl.u32 %v398, 7
    %v400 = vsub.s32 0, %v399
    %v401 = vrot.slane %v382, %v400
    %v402 = vlaneseq
    %v403 = vshrl.u32 %v402, 7
    %v404 = vsub.s32 0, %v403
    %v405 = vrot.slane %v390, %v404
    %v406 = vlaneseq
    %v407 = vshrl.u32 %v406, 7
    %v408 = vsub.s32 0, %v407
    %v409 = vrot.slane %v392, %v408
    %v410 = vlaneseq
    %v411 = vshrl.u32 %v410, 7
    %v412 = vsub.s32 0, %v411
    %v413 = vrot.slane %v375, %v412
    %v414 = vlaneseq
    %v415 = vshrl.u32 %v414, 7
    %v416 = vsub.s32 0, %v415
    %v417 = vrot.slane %v389, %v416
    %v418 = vlaneseq
    %v419 = vshrl.u32 %v418, 7
    %v420 = vsub.s32 0, %v419
    %v421 = vrot.slane %v391, %v420
    %v422 = vlaneseq
    %v423 = vshrl.u32 %v422, 7
    %v424 = vsub.s32 0, %v423
    %v425 = vrot.slane %v393, %v424
    %v434 = vadd.f32 %v108, %v397
    %v435 = vadd.f32 %v109, %v401
    %v436 = vadd.f32 %v110, %v405
    %v437 = vadd.f32 %v111, %v409
    %v438 = vadd.f32 %v112, %v413
    %v439 = vadd.f32 %v113, %v417
    %v440 = vadd.f32 %v114, %v421
    %v441 = vadd.f32 %v115, %v425
    %v442 = vtanh.pop %v434
    %v443 = vtanh.pop %v435
    %v444 = vtanh.pop %v436
    %v445 = vtanh.pop %v437
    %v446 = vtanh.pop %v438
    %v447 = vtanh.pop %v439
    %v448 = vtanh.pop %v440
    %v449 = vtanh.pop %v441
    %v450 = vld [vmem:[%s6] sm:$0x1]
    %v452 = vlaneseq
    %v453 = vshrl.u32 %v452, 7
    %v454 = vsub.s32 0, %v453
    %v455 = vrot.slane %v450, %v454
    %v457 = vmul.f32 %v442, %v455
    %v458 = vmul.f32 %v443, %v455
    %v459 = vmul.f32 %v444, %v455
    %v460 = vmul.f32 %v445, %v455
    %v461 = vmul.f32 %v446, %v455
    %v462 = vmul.f32 %v447, %v455
    %v463 = vmul.f32 %v448, %v455
    %v464 = vmul.f32 %v449, %v455
    %465 = vadd.xlane.f32.xlu0 %v457
    %v466 = vpop.xlane.xlu0 %465
    %467 = vadd.xlane.f32.xlu0 %v458
    %v468 = vpop.xlane.xlu0 %467
    %469 = vadd.xlane.f32.xlu0 %v459
    %v470 = vpop.xlane.xlu0 %469
    %471 = vadd.xlane.f32.xlu0 %v460
    %v472 = vpop.xlane.xlu0 %471
    %473 = vadd.xlane.f32.xlu0 %v461
    %v474 = vpop.xlane.xlu0 %473
    %475 = vadd.xlane.f32.xlu0 %v462
    %v476 = vpop.xlane.xlu0 %475
    %477 = vadd.xlane.f32.xlu0 %v463
    %v478 = vpop.xlane.xlu0 %477
    %479 = vadd.xlane.f32.xlu0 %v464
    %v480 = vpop.xlane.xlu0 %479
    %v481 = vlaneseq
    %v482 = vand.u32 %v481, 127
    %vm483 = vcmp.lt.s32.totalorder %v482, 8
    %v492 = vlaneseq
    %v493 = vshrl.u32 %v492, 7
    %v494 = vsub.s32 %v482, %v493
    %v495 = vrot.slane %v466, %v494
    %v496 = vlaneseq
    %v497 = vshrl.u32 %v496, 7
    %v498 = vsub.s32 %v482, %v497
    %v499 = vrot.slane %v468, %v498
    %v500 = vlaneseq
    %v501 = vshrl.u32 %v500, 7
    %v502 = vsub.s32 %v482, %v501
    %v503 = vrot.slane %v470, %v502
    %v504 = vlaneseq
    %v505 = vshrl.u32 %v504, 7
    %v506 = vsub.s32 %v482, %v505
    %v507 = vrot.slane %v472, %v506
    %v508 = vlaneseq
    %v509 = vshrl.u32 %v508, 7
    %v510 = vsub.s32 %v482, %v509
    %v511 = vrot.slane %v474, %v510
    %v512 = vlaneseq
    %v513 = vshrl.u32 %v512, 7
    %v514 = vsub.s32 %v482, %v513
    %v515 = vrot.slane %v476, %v514
    %v516 = vlaneseq
    %v517 = vshrl.u32 %v516, 7
    %v518 = vsub.s32 %v482, %v517
    %v519 = vrot.slane %v478, %v518
    %v520 = vlaneseq
    %v521 = vshrl.u32 %v520, 7
    %v522 = vsub.s32 %v482, %v521
    %v523 = vrot.slane %v480, %v522
    %vm524 = vcmask 1041409
    %v525 = vsel %vm524, %v499, %v495
    %vm526 = vcmask 1042434
    %v527 = vsel %vm526, %v503, %v525
    %vm528 = vcmask 1043459
    %v529 = vsel %vm528, %v507, %v527
    %vm530 = vcmask 1044484
    %v531 = vsel %vm530, %v511, %v529
    %vm532 = vcmask 1045509
    %v533 = vsel %vm532, %v515, %v531
    %vm534 = vcmask 1046534
    %v535 = vsel %vm534, %v519, %v533
    %vm536 = vcmask 1047559
    %v537 = vsel %vm536, %v523, %v535
    %v539 = vsel %vm483, %v537, -1e+30
    %vm540 = vcmask 64512
    %v541 = vsel %vm540, %v539, -inf
    %542 = vmax.xlane.f32.xlu0 %v541
    %v543 = vpop.xlane.xlu0 %542
    %v544 = vsub.f32 %v539, %v543
    %v545 = vmul.f32 %v544, 1.442695
    %v546 = vpow.pop %v545
    %v547 = vsel %vm540, %v546, 0.0
    %548 = vadd.xlane.f32.xlu0 %v547
    %v549 = vpop.xlane.xlu0 %548
    %v550 = vrcp.pop %v549
    %v551 = vmul.f32 %v546, %v550
    %v552 = vlaneseq
    %v553 = vshrl.u32 %v552, 7
    %v554 = vsub.s32 0, %v553
    %v555 = vrot.slane %v551, %v554
    %557 = vbcast.lane.b32.xlu0 %v555, 256
    %v558 = vpop.permute.xlu0 %557
    %v559 = vlaneseq
    %v560 = vshrl.u32 %v559, 7
    %v561 = vsub.s32 1, %v560
    %v562 = vrot.slane %v551, %v561
    %564 = vbcast.lane.b32.xlu0 %v562, 256
    %v565 = vpop.permute.xlu0 %564
    %v566 = vlaneseq
    %v567 = vshrl.u32 %v566, 7
    %v568 = vsub.s32 2, %v567
    %v569 = vrot.slane %v551, %v568
    %571 = vbcast.lane.b32.xlu0 %v569, 256
    %v572 = vpop.permute.xlu0 %571
    %v573 = vlaneseq
    %v574 = vshrl.u32 %v573, 7
    %v575 = vsub.s32 3, %v574
    %v576 = vrot.slane %v551, %v575
    %578 = vbcast.lane.b32.xlu0 %v576, 256
    %v579 = vpop.permute.xlu0 %578
    %v580 = vlaneseq
    %v581 = vshrl.u32 %v580, 7
    %v582 = vsub.s32 4, %v581
    %v583 = vrot.slane %v551, %v582
    %585 = vbcast.lane.b32.xlu0 %v583, 256
    %v586 = vpop.permute.xlu0 %585
    %v587 = vlaneseq
    %v588 = vshrl.u32 %v587, 7
    %v589 = vsub.s32 5, %v588
    %v590 = vrot.slane %v551, %v589
    %592 = vbcast.lane.b32.xlu0 %v590, 256
    %v593 = vpop.permute.xlu0 %592
    %v594 = vlaneseq
    %v595 = vshrl.u32 %v594, 7
    %v596 = vsub.s32 6, %v595
    %v597 = vrot.slane %v551, %v596
    %599 = vbcast.lane.b32.xlu0 %v597, 256
    %v600 = vpop.permute.xlu0 %599
    %v601 = vlaneseq
    %v602 = vshrl.u32 %v601, 7
    %v603 = vsub.s32 7, %v602
    %v604 = vrot.slane %v551, %v603
    %606 = vbcast.lane.b32.xlu0 %v604, 256
    %v607 = vpop.permute.xlu0 %606
    %v608 = vmul.f32 %v558, %v92
    %v609 = vmul.f32 %v565, %v93
    %v610 = vmul.f32 %v572, %v94
    %v611 = vmul.f32 %v579, %v95
    %v612 = vmul.f32 %v586, %v96
    %v613 = vmul.f32 %v593, %v97
    %v614 = vmul.f32 %v600, %v98
    %v615 = vmul.f32 %v607, %v99
    %v616 = vrot.slane %v608, 4
    %v617 = vadd.f32 %v608, %v616
    %v618 = vrot.slane %v617, 2
    %v619 = vadd.f32 %v617, %v618
    %v620 = vrot.slane %v619, 1
    %v621 = vadd.f32 %v619, %v620
    %v622 = vrot.slane %v609, 4
    %v623 = vadd.f32 %v609, %v622
    %v624 = vrot.slane %v623, 2
    %v625 = vadd.f32 %v623, %v624
    %v626 = vrot.slane %v625, 1
    %v627 = vadd.f32 %v625, %v626
    %v628 = vrot.slane %v610, 4
    %v629 = vadd.f32 %v610, %v628
    %v630 = vrot.slane %v629, 2
    %v631 = vadd.f32 %v629, %v630
    %v632 = vrot.slane %v631, 1
    %v633 = vadd.f32 %v631, %v632
    %v634 = vrot.slane %v611, 4
    %v635 = vadd.f32 %v611, %v634
    %v636 = vrot.slane %v635, 2
    %v637 = vadd.f32 %v635, %v636
    %v638 = vrot.slane %v637, 1
    %v639 = vadd.f32 %v637, %v638
    %v640 = vrot.slane %v612, 4
    %v641 = vadd.f32 %v612, %v640
    %v642 = vrot.slane %v641, 2
    %v643 = vadd.f32 %v641, %v642
    %v644 = vrot.slane %v643, 1
    %v645 = vadd.f32 %v643, %v644
    %v646 = vrot.slane %v613, 4
    %v647 = vadd.f32 %v613, %v646
    %v648 = vrot.slane %v647, 2
    %v649 = vadd.f32 %v647, %v648
    %v650 = vrot.slane %v649, 1
    %v651 = vadd.f32 %v649, %v650
    %v652 = vrot.slane %v614, 4
    %v653 = vadd.f32 %v614, %v652
    %v654 = vrot.slane %v653, 2
    %v655 = vadd.f32 %v653, %v654
    %v656 = vrot.slane %v655, 1
    %v657 = vadd.f32 %v655, %v656
    %v658 = vrot.slane %v615, 4
    %v659 = vadd.f32 %v615, %v658
    %v660 = vrot.slane %v659, 2
    %v661 = vadd.f32 %v659, %v660
    %v662 = vrot.slane %v661, 1
    %v663 = vadd.f32 %v661, %v662
    %664 = vst [vmem:[#allocation2] sm:$0xff] %v82
    %v673 = vsel %vm524, %v627, %v621
    %v674 = vsel %vm526, %v633, %v673
    %v675 = vsel %vm528, %v639, %v674
    %v676 = vsel %vm530, %v645, %v675
    %v677 = vsel %vm532, %v651, %v676
    %v678 = vsel %vm534, %v657, %v677
    %v679 = vsel %vm536, %v663, %v678
    %681 = vst [vmem:[#allocation2 + $0x8] sm:$0xff] %v679
    %v682 = vld [vmem:[#allocation2] sm:$0xff]
    %v683 = vld [vmem:[#allocation2 + $0x8] sm:$0xff]
    %v684 = vld [vmem:[#allocation6] sm:$0xff]
    %v685 = vld [vmem:[#allocation6 + $0x8] sm:$0xff]
    %v686 = vld [vmem:[#allocation6 + $0x10] sm:$0xff]
    %v687 = vld [vmem:[#allocation6 + $0x18] sm:$0xff]
    %v688 = vld [vmem:[#allocation6 + $0x20] sm:$0xff]
    %v689 = vld [vmem:[#allocation6 + $0x28] sm:$0xff]
    %v690 = vld [vmem:[#allocation6 + $0x30] sm:$0xff]
    %v691 = vld [vmem:[#allocation6 + $0x38] sm:$0xff]
    %v692 = vld [vmem:[#allocation6 + $0x40] sm:$0xff]
    %v693 = vld [vmem:[#allocation6 + $0x48] sm:$0xff]
    %v694 = vld [vmem:[#allocation6 + $0x50] sm:$0xff]
    %v695 = vld [vmem:[#allocation6 + $0x58] sm:$0xff]
    %v696 = vld [vmem:[#allocation6 + $0x60] sm:$0xff]
    %v697 = vld [vmem:[#allocation6 + $0x68] sm:$0xff]
    %v698 = vld [vmem:[#allocation6 + $0x70] sm:$0xff]
    %v699 = vld [vmem:[#allocation6 + $0x78] sm:$0xff]
    %v700 = vld [vmem:[#allocation6 + $0x80] sm:$0xff]
    %v701 = vld [vmem:[#allocation6 + $0x88] sm:$0xff]
    %v702 = vld [vmem:[#allocation6 + $0x90] sm:$0xff]
    %v703 = vld [vmem:[#allocation6 + $0x98] sm:$0xff]
    %v704 = vld [vmem:[#allocation6 + $0xa0] sm:$0xff]
    %v705 = vld [vmem:[#allocation6 + $0xa8] sm:$0xff]
    %v706 = vld [vmem:[#allocation6 + $0xb0] sm:$0xff]
    %v707 = vld [vmem:[#allocation6 + $0xb8] sm:$0xff]
    %v708 = vld [vmem:[#allocation6 + $0xc0] sm:$0xff]
    %v709 = vld [vmem:[#allocation6 + $0xc8] sm:$0xff]
    %v710 = vld [vmem:[#allocation6 + $0xd0] sm:$0xff]
    %v711 = vld [vmem:[#allocation6 + $0xd8] sm:$0xff]
    %v712 = vld [vmem:[#allocation6 + $0xe0] sm:$0xff]
    %v713 = vld [vmem:[#allocation6 + $0xe8] sm:$0xff]
    %v714 = vld [vmem:[#allocation6 + $0xf0] sm:$0xff]
    %v715 = vld [vmem:[#allocation6 + $0xf8] sm:$0xff]
    %v716 = vld [vmem:[#allocation6 + $0x100] sm:$0xff]
    %v717 = vld [vmem:[#allocation6 + $0x108] sm:$0xff]
    %v718 = vld [vmem:[#allocation6 + $0x110] sm:$0xff]
    %v719 = vld [vmem:[#allocation6 + $0x118] sm:$0xff]
    %v720 = vld [vmem:[#allocation6 + $0x120] sm:$0xff]
    %v721 = vld [vmem:[#allocation6 + $0x128] sm:$0xff]
    %v722 = vld [vmem:[#allocation6 + $0x130] sm:$0xff]
    %v723 = vld [vmem:[#allocation6 + $0x138] sm:$0xff]
    %v724 = vld [vmem:[#allocation6 + $0x140] sm:$0xff]
    %v725 = vld [vmem:[#allocation6 + $0x148] sm:$0xff]
    %v726 = vld [vmem:[#allocation6 + $0x150] sm:$0xff]
    %v727 = vld [vmem:[#allocation6 + $0x158] sm:$0xff]
    %v728 = vld [vmem:[#allocation6 + $0x160] sm:$0xff]
    %v729 = vld [vmem:[#allocation6 + $0x168] sm:$0xff]
    %v730 = vld [vmem:[#allocation6 + $0x170] sm:$0xff]
    %v731 = vld [vmem:[#allocation6 + $0x178] sm:$0xff]
    %v732 = vld [vmem:[#allocation6 + $0x180] sm:$0xff]
    %v733 = vld [vmem:[#allocation6 + $0x188] sm:$0xff]
    %v734 = vld [vmem:[#allocation6 + $0x190] sm:$0xff]
    %v735 = vld [vmem:[#allocation6 + $0x198] sm:$0xff]
    %v736 = vld [vmem:[#allocation6 + $0x1a0] sm:$0xff]
    %v737 = vld [vmem:[#allocation6 + $0x1a8] sm:$0xff]
    %v738 = vld [vmem:[#allocation6 + $0x1b0] sm:$0xff]
    %v739 = vld [vmem:[#allocation6 + $0x1b8] sm:$0xff]
    %v740 = vld [vmem:[#allocation6 + $0x1c0] sm:$0xff]
    %v741 = vld [vmem:[#allocation6 + $0x1c8] sm:$0xff]
    %v742 = vld [vmem:[#allocation6 + $0x1d0] sm:$0xff]
    %v743 = vld [vmem:[#allocation6 + $0x1d8] sm:$0xff]
    %v744 = vld [vmem:[#allocation6 + $0x1e0] sm:$0xff]
    %v745 = vld [vmem:[#allocation6 + $0x1e8] sm:$0xff]
    %v746 = vld [vmem:[#allocation6 + $0x1f0] sm:$0xff]
    %v747 = vld [vmem:[#allocation6 + $0x1f8] sm:$0xff]
    %v748 = vld [vmem:[#allocation6 + $0x200] sm:$0xff]
    %v749 = vld [vmem:[#allocation6 + $0x208] sm:$0xff]
    %v750 = vld [vmem:[#allocation6 + $0x210] sm:$0xff]
    %v751 = vld [vmem:[#allocation6 + $0x218] sm:$0xff]
    %v752 = vld [vmem:[#allocation6 + $0x220] sm:$0xff]
    %v753 = vld [vmem:[#allocation6 + $0x228] sm:$0xff]
    %v754 = vld [vmem:[#allocation6 + $0x230] sm:$0xff]
    %v755 = vld [vmem:[#allocation6 + $0x238] sm:$0xff]
    %v756 = vld [vmem:[#allocation6 + $0x240] sm:$0xff]
    %v757 = vld [vmem:[#allocation6 + $0x248] sm:$0xff]
    %v758 = vld [vmem:[#allocation6 + $0x250] sm:$0xff]
    %v759 = vld [vmem:[#allocation6 + $0x258] sm:$0xff]
    %v760 = vld [vmem:[#allocation6 + $0x260] sm:$0xff]
    %v761 = vld [vmem:[#allocation6 + $0x268] sm:$0xff]
    %v762 = vld [vmem:[#allocation6 + $0x270] sm:$0xff]
    %v763 = vld [vmem:[#allocation6 + $0x278] sm:$0xff]
    %v764 = vld [vmem:[#allocation6 + $0x280] sm:$0xff]
    %v765 = vld [vmem:[#allocation6 + $0x288] sm:$0xff]
    %v766 = vld [vmem:[#allocation6 + $0x290] sm:$0xff]
    %v767 = vld [vmem:[#allocation6 + $0x298] sm:$0xff]
    %v768 = vld [vmem:[#allocation6 + $0x2a0] sm:$0xff]
    %v769 = vld [vmem:[#allocation6 + $0x2a8] sm:$0xff]
    %v770 = vld [vmem:[#allocation6 + $0x2b0] sm:$0xff]
    %v771 = vld [vmem:[#allocation6 + $0x2b8] sm:$0xff]
    %v772 = vld [vmem:[#allocation6 + $0x2c0] sm:$0xff]
    %v773 = vld [vmem:[#allocation6 + $0x2c8] sm:$0xff]
    %v774 = vld [vmem:[#allocation6 + $0x2d0] sm:$0xff]
    %v775 = vld [vmem:[#allocation6 + $0x2d8] sm:$0xff]
    %v776 = vld [vmem:[#allocation6 + $0x2e0] sm:$0xff]
    %v777 = vld [vmem:[#allocation6 + $0x2e8] sm:$0xff]
    %v778 = vld [vmem:[#allocation6 + $0x2f0] sm:$0xff]
    %v779 = vld [vmem:[#allocation6 + $0x2f8] sm:$0xff]
    %v780 = vld [vmem:[%s8] sm:$0x7]
    %v782 = vlaneseq
    %v783 = vshrl.u32 %v782, 7
    %v784 = vsub.s32 0, %v783
    %v785 = vrot.slane %v780, %v784
    %v786 = vlaneseq
    %v787 = vshrl.u32 %v786, 7
    %v788 = vsub.s32 1, %v787
    %v789 = vrot.slane %v780, %v788
    %v790 = vlaneseq
    %v791 = vshrl.u32 %v790, 7
    %v792 = vsub.s32 2, %v791
    %v793 = vrot.slane %v780, %v792
    %797 = vmatprep.subr.mxu0 %v685
    %798 = vmatpush1.msra.mxu0 %v684
    %799 = vmatprep.subr.mxu0 %v688
    %800 = vmatpush1.msra.mxu0 %v687
    %801 = vmatprep.subr.mxu0 %v691
    %802 = vmatpush1.msra.mxu0 %v690
    %803 = vmatprep.subr.mxu0 %v694
    %804 = vmatpush1.msra.mxu0 %v693
    %805 = vmatprep.subr.mxu0 %v697
    %806 = vmatpush1.msra.mxu0 %v696
    %807 = vmatprep.subr.mxu0 %v700
    %808 = vmatpush1.msra.mxu0 %v699
    %809 = vmatprep.subr.mxu0 %v703
    %810 = vmatpush1.msra.mxu0 %v702
    %811 = vmatprep.subr.mxu0 %v706
    %812 = vmatpush1.msra.mxu0 %v705
    %813 = vmatprep.subr.mxu0 %v709
    %814 = vmatpush1.msra.mxu0 %v708
    %815 = vmatprep.subr.mxu0 %v712
    %816 = vmatpush1.msra.mxu0 %v711
    %817 = vmatprep.subr.mxu0 %v715
    %818 = vmatpush1.msra.mxu0 %v714
    %819 = vmatprep.subr.mxu0 %v718
    %820 = vmatpush1.msra.mxu0 %v717
    %821 = vmatprep.subr.mxu0 %v721
    %822 = vmatpush1.msra.mxu0 %v720
    %823 = vmatprep.subr.mxu0 %v724
    %824 = vmatpush1.msra.mxu0 %v723
    %825 = vmatprep.subr.mxu0 %v727
    %826 = vmatpush1.msra.mxu0 %v726
    %827 = vmatprep.subr.mxu0 %v730
    %828 = vmatpush1.msra.mxu0 %v729
    %829 = vmatprep.subr.mxu0 %v733
    %830 = vmatpush1.msra.mxu0 %v732
    %831 = vmatprep.subr.mxu0 %v736
    %832 = vmatpush1.msra.mxu0 %v735
    %833 = vmatprep.subr.mxu0 %v739
    %834 = vmatpush1.msra.mxu0 %v738
    %835 = vmatprep.subr.mxu0 %v742
    %836 = vmatpush1.msra.mxu0 %v741
    %837 = vmatprep.subr.mxu0 %v745
    %838 = vmatpush1.msra.mxu0 %v744
    %839 = vmatprep.subr.mxu0 %v748
    %840 = vmatpush1.msra.mxu0 %v747
    %841 = vmatprep.subr.mxu0 %v751
    %842 = vmatpush1.msra.mxu0 %v750
    %843 = vmatprep.subr.mxu0 %v754
    %844 = vmatpush1.msra.mxu0 %v753
    %845 = vmatprep.subr.mxu0 %v757
    %846 = vmatpush1.msra.mxu0 %v756
    %847 = vmatprep.subr.mxu0 %v760
    %848 = vmatpush1.msra.mxu0 %v759
    %849 = vmatprep.subr.mxu0 %v763
    %850 = vmatpush1.msra.mxu0 %v762
    %851 = vmatprep.subr.mxu0 %v766
    %852 = vmatpush1.msra.mxu0 %v765
    %853 = vmatprep.subr.mxu0 %v769
    %854 = vmatpush1.msra.mxu0 %v768
    %855 = vmatprep.subr.mxu0 %v772
    %856 = vmatpush1.msra.mxu0 %v771
    %857 = vmatprep.subr.mxu0 %v775
    %858 = vmatpush1.msra.mxu0 %v774
    %859 = vmatprep.subr.mxu0 %v778
    %860 = vmatpush1.msra.mxu0 %v777
    %861 = vmatprep.mubr.f32.mxu0 %v683
    %862 = vmatmul.mubr.f32.gmra.mrb[0].mxu0 %v682
    %v863 = vpop.f32.mrb[0].mxu0
    %v864 = vadd.f32 %v785, %v863
    %v865 = vpop.f32.mrb[0].mxu0
    %v866 = vadd.f32 %v789, %v865
    %867 = vdwg.mxu0
    %868 = vmatprep.subr.mxu0 0.0
    %869 = vmatpush1.msra.mxu0 %v686
    %870 = vmatprep.subr.mxu0 0.0
    %871 = vmatpush1.msra.mxu0 %v689
    %872 = vmatprep.subr.mxu0 0.0
    %873 = vmatpush1.msra.mxu0 %v692
    %874 = vmatprep.subr.mxu0 0.0
    %875 = vmatpush1.msra.mxu0 %v695
    %876 = vmatprep.subr.mxu0 0.0
    %877 = vmatpush1.msra.mxu0 %v698
    %878 = vmatprep.subr.mxu0 0.0
    %879 = vmatpush1.msra.mxu0 %v701
    %880 = vmatprep.subr.mxu0 0.0
    %881 = vmatpush1.msra.mxu0 %v704
    %882 = vmatprep.subr.mxu0 0.0
    %883 = vmatpush1.msra.mxu0 %v707
    %884 = vmatprep.subr.mxu0 0.0
    %885 = vmatpush1.msra.mxu0 %v710
    %886 = vmatprep.subr.mxu0 0.0
    %887 = vmatpush1.msra.mxu0 %v713
    %888 = vmatprep.subr.mxu0 0.0
    %889 = vmatpush1.msra.mxu0 %v716
    %890 = vmatprep.subr.mxu0 0.0
    %891 = vmatpush1.msra.mxu0 %v719
    %892 = vmatprep.subr.mxu0 0.0
    %893 = vmatpush1.msra.mxu0 %v722
    %894 = vmatprep.subr.mxu0 0.0
    %895 = vmatpush1.msra.mxu0 %v725
    %896 = vmatprep.subr.mxu0 0.0
    %897 = vmatpush1.msra.mxu0 %v728
    %898 = vmatprep.subr.mxu0 0.0
    %899 = vmatpush1.msra.mxu0 %v731
    %900 = vmatprep.subr.mxu0 0.0
    %901 = vmatpush1.msra.mxu0 %v734
    %902 = vmatprep.subr.mxu0 0.0
    %903 = vmatpush1.msra.mxu0 %v737
    %904 = vmatprep.subr.mxu0 0.0
    %905 = vmatpush1.msra.mxu0 %v740
    %906 = vmatprep.subr.mxu0 0.0
    %907 = vmatpush1.msra.mxu0 %v743
    %908 = vmatprep.subr.mxu0 0.0
    %909 = vmatpush1.msra.mxu0 %v746
    %910 = vmatprep.subr.mxu0 0.0
    %911 = vmatpush1.msra.mxu0 %v749
    %912 = vmatprep.subr.mxu0 0.0
    %913 = vmatpush1.msra.mxu0 %v752
    %914 = vmatprep.subr.mxu0 0.0
    %915 = vmatpush1.msra.mxu0 %v755
    %916 = vmatprep.subr.mxu0 0.0
    %917 = vmatpush1.msra.mxu0 %v758
    %918 = vmatprep.subr.mxu0 0.0
    %919 = vmatpush1.msra.mxu0 %v761
    %920 = vmatprep.subr.mxu0 0.0
    %921 = vmatpush1.msra.mxu0 %v764
    %922 = vmatprep.subr.mxu0 0.0
    %923 = vmatpush1.msra.mxu0 %v767
    %924 = vmatprep.subr.mxu0 0.0
    %925 = vmatpush1.msra.mxu0 %v770
    %926 = vmatprep.subr.mxu0 0.0
    %927 = vmatpush1.msra.mxu0 %v773
    %928 = vmatprep.subr.mxu0 0.0
    %929 = vmatpush1.msra.mxu0 %v776
    %930 = vmatprep.subr.mxu0 0.0
    %931 = vmatpush1.msra.mxu0 %v779
    %932 = vmatprep.mubr.f32.mxu0 %v683
    %933 = vmatmul.mubr.f32.gmra.mrb[0].mxu0 %v682
    %v934 = vpop.f32.mrb[0].mxu0
    %v935 = vadd.f32 %v793, %v934
    %v936 = vpop.f32.mrb[0].mxu0
    %937 = vdwg.mxu0
    %v938 = vadd.f32 %v864, %v271
    %v939 = vxor.u32 %v938, 2147483648
    %v940 = vmul.f32 %v939, 1.442695
    %v941 = vpow.pop %v940
    %v942 = vadd.f32 %v941, 1.0
    %v943 = vrcp.pop %v942
    %v944 = vmul.f32 1.0, %v943
    %v945 = vadd.f32 %v866, %v340
    %v946 = vxor.u32 %v945, 2147483648
    %v947 = vmul.f32 %v946, 1.442695
    %v948 = vpow.pop %v947
    %v949 = vadd.f32 %v948, 1.0
    %v950 = vrcp.pop %v949
    %v951 = vmul.f32 1.0, %v950
    %v952 = vmul.f32 %v944, %v342
    %v953 = vadd.f32 %v935, %v952
    %v954 = vtanh.pop %v953
    %v955 = vsub.f32 1.0, %v951
    %v956 = vmul.f32 %v955, %v954
    %v957 = vmul.f32 %v951, %v83
    %v958 = vadd.f32 %v956, %v957
    %959 = vst [vmem:[#allocation3] sm:$0xff] %v958
    %960 = vst [vmem:[#allocation3 + $0x8] sm:$0xff] %v679
    %961 = vst [vmem:[#allocation3 + $0x10] sm:$0xff] %v82
    %v962 = vld [vmem:[#allocation3] sm:$0xff]
    %v963 = vld [vmem:[#allocation3 + $0x8] sm:$0xff]
    %v964 = vld [vmem:[#allocation3 + $0x10] sm:$0xff]
    %v965 = vld [vmem:[#allocation8] sm:$0xff]
    %v966 = vld [vmem:[#allocation8 + $0x8] sm:$0xff]
    %v967 = vld [vmem:[#allocation8 + $0x10] sm:$0xff]
    %v968 = vld [vmem:[#allocation8 + $0x18] sm:$0xff]
    %v969 = vld [vmem:[#allocation8 + $0x20] sm:$0xff]
    %v970 = vld [vmem:[#allocation8 + $0x28] sm:$0xff]
    %v971 = vld [vmem:[#allocation8 + $0x30] sm:$0xff]
    %v972 = vld [vmem:[#allocation8 + $0x38] sm:$0xff]
    %v973 = vld [vmem:[#allocation8 + $0x40] sm:$0xff]
    %v974 = vld [vmem:[#allocation8 + $0x48] sm:$0xff]
    %v975 = vld [vmem:[#allocation8 + $0x50] sm:$0xff]
    %v976 = vld [vmem:[#allocation8 + $0x58] sm:$0xff]
    %v977 = vld [vmem:[#allocation8 + $0x60] sm:$0xff]
    %v978 = vld [vmem:[#allocation8 + $0x68] sm:$0xff]
    %v979 = vld [vmem:[#allocation8 + $0x70] sm:$0xff]
    %v980 = vld [vmem:[#allocation8 + $0x78] sm:$0xff]
    %v981 = vld [vmem:[#allocation8 + $0x80] sm:$0xff]
    %v982 = vld [vmem:[#allocation8 + $0x88] sm:$0xff]
    %v983 = vld [vmem:[#allocation8 + $0x90] sm:$0xff]
    %v984 = vld [vmem:[#allocation8 + $0x98] sm:$0xff]
    %v985 = vld [vmem:[#allocation8 + $0xa0] sm:$0xff]
    %v986 = vld [vmem:[#allocation8 + $0xa8] sm:$0xff]
    %v987 = vld [vmem:[#allocation8 + $0xb0] sm:$0xff]
    %v988 = vld [vmem:[#allocation8 + $0xb8] sm:$0xff]
    %v989 = vld [vmem:[#allocation8 + $0xc0] sm:$0xff]
    %v990 = vld [vmem:[#allocation8 + $0xc8] sm:$0xff]
    %v991 = vld [vmem:[#allocation8 + $0xd0] sm:$0xff]
    %v992 = vld [vmem:[#allocation8 + $0xd8] sm:$0xff]
    %v993 = vld [vmem:[#allocation8 + $0xe0] sm:$0xff]
    %v994 = vld [vmem:[#allocation8 + $0xe8] sm:$0xff]
    %v995 = vld [vmem:[#allocation8 + $0xf0] sm:$0xff]
    %v996 = vld [vmem:[#allocation8 + $0xf8] sm:$0xff]
    %v997 = vld [vmem:[#allocation8 + $0x100] sm:$0xff]
    %v998 = vld [vmem:[#allocation8 + $0x108] sm:$0xff]
    %v999 = vld [vmem:[#allocation8 + $0x110] sm:$0xff]
    %v1000 = vld [vmem:[#allocation8 + $0x118] sm:$0xff]
    %v1001 = vld [vmem:[#allocation8 + $0x120] sm:$0xff]
    %v1002 = vld [vmem:[#allocation8 + $0x128] sm:$0xff]
    %v1003 = vld [vmem:[#allocation8 + $0x130] sm:$0xff]
    %v1004 = vld [vmem:[#allocation8 + $0x138] sm:$0xff]
    %v1005 = vld [vmem:[#allocation8 + $0x140] sm:$0xff]
    %v1006 = vld [vmem:[#allocation8 + $0x148] sm:$0xff]
    %v1007 = vld [vmem:[#allocation8 + $0x150] sm:$0xff]
    %v1008 = vld [vmem:[#allocation8 + $0x158] sm:$0xff]
    %v1009 = vld [vmem:[#allocation8 + $0x160] sm:$0xff]
    %v1010 = vld [vmem:[#allocation8 + $0x168] sm:$0xff]
    %v1011 = vld [vmem:[#allocation8 + $0x170] sm:$0xff]
    %v1012 = vld [vmem:[#allocation8 + $0x178] sm:$0xff]
    %v1013 = vld [vmem:[%s10] sm:$0x1]
    %v1015 = vlaneseq
    %v1016 = vshrl.u32 %v1015, 7
    %v1017 = vsub.s32 0, %v1016
    %v1018 = vrot.slane %v1013, %v1017
    %1020 = vmatprep.subr.mxu0 0.0
    %1021 = vmatpush1.msra.mxu0 %v965
    %1022 = vmatprep.subr.mxu0 0.0
    %1023 = vmatpush1.msra.mxu0 %v966
    %1024 = vmatprep.subr.mxu0 0.0
    %1025 = vmatpush1.msra.mxu0 %v967
    %1026 = vmatprep.subr.mxu0 0.0
    %1027 = vmatpush1.msra.mxu0 %v968
    %1028 = vmatprep.subr.mxu0 0.0
    %1029 = vmatpush1.msra.mxu0 %v969
    %1030 = vmatprep.subr.mxu0 0.0
    %1031 = vmatpush1.msra.mxu0 %v970
    %1032 = vmatprep.subr.mxu0 0.0
    %1033 = vmatpush1.msra.mxu0 %v971
    %1034 = vmatprep.subr.mxu0 0.0
    %1035 = vmatpush1.msra.mxu0 %v972
    %1036 = vmatprep.subr.mxu0 0.0
    %1037 = vmatpush1.msra.mxu0 %v973
    %1038 = vmatprep.subr.mxu0 0.0
    %1039 = vmatpush1.msra.mxu0 %v974
    %1040 = vmatprep.subr.mxu0 0.0
    %1041 = vmatpush1.msra.mxu0 %v975
    %1042 = vmatprep.subr.mxu0 0.0
    %1043 = vmatpush1.msra.mxu0 %v976
    %1044 = vmatprep.subr.mxu0 0.0
    %1045 = vmatpush1.msra.mxu0 %v977
    %1046 = vmatprep.subr.mxu0 0.0
    %1047 = vmatpush1.msra.mxu0 %v978
    %1048 = vmatprep.subr.mxu0 0.0
    %1049 = vmatpush1.msra.mxu0 %v979
    %1050 = vmatprep.subr.mxu0 0.0
    %1051 = vmatpush1.msra.mxu0 %v980
    %1052 = vmatprep.subr.mxu0 0.0
    %1053 = vmatpush1.msra.mxu0 %v981
    %1054 = vmatprep.subr.mxu0 0.0
    %1055 = vmatpush1.msra.mxu0 %v982
    %1056 = vmatprep.subr.mxu0 0.0
    %1057 = vmatpush1.msra.mxu0 %v983
    %1058 = vmatprep.subr.mxu0 0.0
    %1059 = vmatpush1.msra.mxu0 %v984
    %1060 = vmatprep.subr.mxu0 0.0
    %1061 = vmatpush1.msra.mxu0 %v985
    %1062 = vmatprep.subr.mxu0 0.0
    %1063 = vmatpush1.msra.mxu0 %v986
    %1064 = vmatprep.subr.mxu0 0.0
    %1065 = vmatpush1.msra.mxu0 %v987
    %1066 = vmatprep.subr.mxu0 0.0
    %1067 = vmatpush1.msra.mxu0 %v988
    %1068 = vmatprep.subr.mxu0 0.0
    %1069 = vmatpush1.msra.mxu0 %v989
    %1070 = vmatprep.subr.mxu0 0.0
    %1071 = vmatpush1.msra.mxu0 %v990
    %1072 = vmatprep.subr.mxu0 0.0
    %1073 = vmatpush1.msra.mxu0 %v991
    %1074 = vmatprep.subr.mxu0 0.0
    %1075 = vmatpush1.msra.mxu0 %v992
    %1076 = vmatprep.subr.mxu0 0.0
    %1077 = vmatpush1.msra.mxu0 %v993
    %1078 = vmatprep.subr.mxu0 0.0
    %1079 = vmatpush1.msra.mxu0 %v994
    %1080 = vmatprep.subr.mxu0 0.0
    %1081 = vmatpush1.msra.mxu0 %v995
    %1082 = vmatprep.subr.mxu0 0.0
    %1083 = vmatpush1.msra.mxu0 %v996
    %1084 = vmatprep.mubr.f32.mxu0 %v963
    %1085 = vmatmul.mubr.f32.gmra.mrb[0].mxu0 %v962
    %v1086 = vpop.f32.mrb[0].mxu0
    %v1087 = vadd.f32 %v1018, %v1086
    %v1088 = vpop.f32.mrb[0].mxu0
    %1089 = vdwg.mxu0
    %1090 = vmatprep.subr.mxu0 0.0
    %1091 = vmatpush1.msra.mxu0 %v997
    %1092 = vmatprep.subr.mxu0 0.0
    %1093 = vmatpush1.msra.mxu0 %v998
    %1094 = vmatprep.subr.mxu0 0.0
    %1095 = vmatpush1.msra.mxu0 %v999
    %1096 = vmatprep.subr.mxu0 0.0
    %1097 = vmatpush1.msra.mxu0 %v1000
    %1098 = vmatprep.subr.mxu0 0.0
    %1099 = vmatpush1.msra.mxu0 %v1001
    %1100 = vmatprep.subr.mxu0 0.0
    %1101 = vmatpush1.msra.mxu0 %v1002
    %1102 = vmatprep.subr.mxu0 0.0
    %1103 = vmatpush1.msra.mxu0 %v1003
    %1104 = vmatprep.subr.mxu0 0.0
    %1105 = vmatpush1.msra.mxu0 %v1004
    %1106 = vmatprep.subr.mxu0 0.0
    %1107 = vmatpush1.msra.mxu0 %v1005
    %1108 = vmatprep.subr.mxu0 0.0
    %1109 = vmatpush1.msra.mxu0 %v1006
    %1110 = vmatprep.subr.mxu0 0.0
    %1111 = vmatpush1.msra.mxu0 %v1007
    %1112 = vmatprep.subr.mxu0 0.0
    %1113 = vmatpush1.msra.mxu0 %v1008
    %1114 = vmatprep.subr.mxu0 0.0
    %1115 = vmatpush1.msra.mxu0 %v1009
    %1116 = vmatprep.subr.mxu0 0.0
    %1117 = vmatpush1.msra.mxu0 %v1010
    %1118 = vmatprep.subr.mxu0 0.0
    %1119 = vmatpush1.msra.mxu0 %v1011
    %1120 = vmatprep.subr.mxu0 0.0
    %1121 = vmatpush1.msra.mxu0 %v1012
    %1122 = vmatprep.subr.mxu0 0.0
    %1123 = vmatpush1.msra.mxu0 0.0
    %1124 = vmatprep.subr.mxu0 0.0
    %1125 = vmatpush1.msra.mxu0 0.0
    %1126 = vmatprep.subr.mxu0 0.0
    %1127 = vmatpush1.msra.mxu0 0.0
    %1128 = vmatprep.subr.mxu0 0.0
    %1129 = vmatpush1.msra.mxu0 0.0
    %1130 = vmatprep.subr.mxu0 0.0
    %1131 = vmatpush1.msra.mxu0 0.0
    %1132 = vmatprep.subr.mxu0 0.0
    %1133 = vmatpush1.msra.mxu0 0.0
    %1134 = vmatprep.subr.mxu0 0.0
    %1135 = vmatpush1.msra.mxu0 0.0
    %1136 = vmatprep.subr.mxu0 0.0
    %1137 = vmatpush1.msra.mxu0 0.0
    %1138 = vmatprep.subr.mxu0 0.0
    %1139 = vmatpush1.msra.mxu0 0.0
    %1140 = vmatprep.subr.mxu0 0.0
    %1141 = vmatpush1.msra.mxu0 0.0
    %1142 = vmatprep.subr.mxu0 0.0
    %1143 = vmatpush1.msra.mxu0 0.0
    %1144 = vmatprep.subr.mxu0 0.0
    %1145 = vmatpush1.msra.mxu0 0.0
    %1146 = vmatprep.subr.mxu0 0.0
    %1147 = vmatpush1.msra.mxu0 0.0
    %1148 = vmatprep.subr.mxu0 0.0
    %1149 = vmatpush1.msra.mxu0 0.0
    %1150 = vmatprep.subr.mxu0 0.0
    %1151 = vmatpush1.msra.mxu0 0.0
    %1152 = vmatprep.subr.mxu0 0.0
    %1153 = vmatpush1.msra.mxu0 0.0
    %1154 = vmatprep.mubr.f32.mxu0 0.0
    %1155 = vmatmul.mubr.f32.gmra.mrb[0].mxu0 %v964
    %v1156 = vpop.f32.mrb[0].mxu0
    %v1157 = vadd.f32 %v1087, %v1156
    %v1158 = vpop.f32.mrb[0].mxu0
    %1159 = vdwg.mxu0
    %1160 = vst [vmem:[%s11] sm:$0xff] %v1157
    %1161 = vst [vmem:[%s12] sm:$0xff] %v958
    %1162 = vst.msk [vmem:[%s13] sm:$0xff] %vm540, %v551
    // Predicated region
    $region58: #{decoder_forward.3} parent=1 // pred_check
      _
    $region59: #{decoder_forward.3} parent=1 // pred_check_branch
      %1164 = sbr.rel (0) target = $region61
    $region60: #{decoder_forward.3} parent=1 // pred_region
      _
    $region61: #{decoder_forward.3} parent=1 // pred_fallthru
      _
    // Predicated region
    $region62: #{decoder_forward.3} parent=1 // pred_check
      _
    $region63: #{decoder_forward.3} parent=1 // pred_check_branch
      %1166 = sbr.rel (0) target = $region65
    $region64: #{decoder_forward.3} parent=1 // pred_region
      _
    $region65: #{decoder_forward.3} parent=1 // pred_fallthru
      _
    // Predicated region
    $region66: #{decoder_forward.3} parent=1 // pred_check
      _
    $region67: #{decoder_forward.3} parent=1 // pred_check_branch
      %1168 = sbr.rel (0) target = $region69
    $region68: #{decoder_forward.3} parent=1 // pred_region
      _
    $region69: #{decoder_forward.3} parent=1 // pred_fallthru
      _
    // Predicated region
    $region70: #{decoder_forward.3} parent=1 // pred_check
      _
    $region71: #{decoder_forward.3} parent=1 // pred_check_branch
      %1170 = sbr.rel (0) target = $region73
    $region72: #{decoder_forward.3} parent=1 // pred_region
      _
    $region73: #{decoder_forward.3} parent=1 // pred_fallthru
      _
    // Predicated region
    $region74: #{decoder_forward.3} parent=1 // pred_check
      _
    $region75: #{decoder_forward.3} parent=1 // pred_check_branch
      %1172 = sbr.rel (0) target = $region77
    $region76: #{decoder_forward.3} parent=1 // pred_region
      _
    $region77: #{decoder_forward.3} parent=1 // pred_fallthru
      _
    // Predicated region
    $region78: #{decoder_forward.3} parent=1 // pred_check
      _
    $region79: #{decoder_forward.3} parent=1 // pred_check_branch
      %1174 = sbr.rel (0) target = $region81
    $region80: #{decoder_forward.3} parent=1 // pred_region
      _
    $region81: #{decoder_forward.3} parent=1 // pred_fallthru
      _
    %1175 = vsyncpa [#allocation5], 1
    %1176 = vsyncpa [#allocation7], 1

</llo_original>
